<compile_context>
chip_gen: v5e
topology: v5e:2x2
jax: 0.10.0
libtpu: 0.0.40
codegen_flags: <defaults>
</compile_context>

<pallas_src>
import functools

import jax
import jax.numpy as jnp
from jax.experimental import pallas as pl
from jax.experimental.pallas import tpu as pltpu

_NEG_MASK = -1e30  # finite "-inf": exp underflows to exactly 0, never produces NaN


def _round_up(x, m):
    return ((x + m - 1) // m) * m


def _vmem_capacity_bytes():
    try:
        return int(pltpu.get_tpu_info().vmem_capacity_bytes)
    except Exception:  # pragma: no cover - conservative fallback
        return 64 * 2 ** 20


def _global_attention_kernel(len_ref,    # SMEM [B]            scalar-prefetched lengths
                             src_ref,    # VMEM [1, tT, Dp]    query tile        (mxu dtype)
                             mem_ref,    # VMEM [1, sT, Dp]    memory-bank chunk (mxu dtype)
                             w_ref,      # VMEM [2*Dp, Dp]     packed linear_out weight^T
                             out_ref,    # VMEM [1, tT, Dp]    attn_h tile (batch-major)
                             attn_ref,   # VMEM [1, tT, Sp]    align tile  (batch-major)
                             *scratch,   # () or (m, l, acc, scores) when S is chunked
                             d_pad, s_tile, n_s, mxu_dtype, approx_recip):
    b = pl.program_id(0)
    s_idx = pl.program_id(2)
    length = len_ref[b]

    src = src_ref[0]                      # [tT, Dp]  (already in MXU dtype)
    mem = mem_ref[0]                      # [sT, Dp]

    # scores[t, s] = sum_d src[t, d] * mem[s, d]  -- contract last dims, no transpose.
    scores = jax.lax.dot_general(
        src, mem, dimension_numbers=(((1,), (1,)), ((), ())),
        preferred_element_type=jnp.float32)                       # [tT, sT] f32

    # Length mask as a [1, sT] additive bias (broadcast over sublanes; no [tT,sT] iota).
    base = s_idx * s_tile
    pos = base + jax.lax.broadcasted_iota(jnp.int32, (1, s_tile), 1)
    bias = jnp.where(pos < length, jnp.float32(0.0), jnp.float32(_NEG_MASK))
    scores = scores + bias

    def _project(c_f32):
        # linear_out([c, src]) = c @ Wc + src @ Ws (no bias for 'dot'), then tanh.
        wc = w_ref[0:d_pad, :]
        ws = w_ref[d_pad:2 * d_pad, :]
        h = (jnp.dot(c_f32.astype(mxu_dtype), wc, preferred_element_type=jnp.float32)
             + jnp.dot(src, ws, preferred_element_type=jnp.float32))
        return jnp.tanh(h)

    if n_s == 1:
        # ---- single-chunk path: whole (padded) bank resident for this batch ----------
        m = jnp.max(scores, axis=-1, keepdims=True)
        p = jnp.exp(scores - m)
        denom = jnp.sum(p, axis=-1, keepdims=True)
        # Unnormalized context first: the MXU starts right after exp, the XLU row-sum and
        # EUP reciprocal move off the matmul critical path and only scale [tT, Dp].
        c_un = jnp.dot(p.astype(mxu_dtype), mem, preferred_element_type=jnp.float32)
        inv = pl.reciprocal(denom, approx=approx_recip)            # [tT, 1]
        out_ref[0] = _project(c_un * inv).astype(out_ref.dtype)
        attn_ref[0] = (p * inv).astype(attn_ref.dtype)
    else:
        # ---- S-tiled online-softmax path (bank streamed in [sT, Dp] chunks) ----------
        m_sc, l_sc, acc_sc, scores_sc = scratch

        @pl.when(s_idx == 0)
        def _init():
            m_sc[...] = jnp.full_like(m_sc, _NEG_MASK)
            l_sc[...] = jnp.zeros_like(l_sc)
            acc_sc[...] = jnp.zeros_like(acc_sc)

        # Stash raw (masked) scores so align can be emitted exactly in the finalize.
        off = pl.multiple_of(base, 128)
        scores_sc[:, pl.ds(off, s_tile)] = scores

        m_prev = m_sc[...]
        m_new = jnp.maximum(m_prev, jnp.max(scores, axis=-1, keepdims=True))
        alpha = jnp.exp(m_prev - m_new)
        p = jnp.exp(scores - m_new)
        l_sc[...] = alpha * l_sc[...] + jnp.sum(p, axis=-1, keepdims=True)
        acc_sc[...] = alpha * acc_sc[...] + jnp.dot(
            p.astype(mxu_dtype), mem, preferred_element_type=jnp.float32)
        m_sc[...] = m_new

        @pl.when(s_idx == n_s - 1)
        def _finalize():
            inv = pl.reciprocal(l_sc[...], approx=approx_recip)     # [tT, 1]
            out_ref[0] = _project(acc_sc[...] * inv).astype(out_ref.dtype)
            align = jnp.exp(scores_sc[...] - m_sc[...]) * inv       # [tT, Sp]
            attn_ref[0] = align.astype(attn_ref.dtype)


def global_attention_dot(source, memory_bank, memory_lengths, w_out, *,
                         block_t=None, block_s=None, mxu_dtype=jnp.bfloat16,
                         approx_recip=False, attn_h_dtype=None, align_dtype=None,
                         time_major=True):
    """
    GlobalAttention forward, attn_type='dot'.

    source:         [B, T, D]  (or [B, D] for one-step decoding)
    memory_bank:    [B, S, D]
    memory_lengths: [B]  int
    w_out:          [D, 2D]  = nn.Linear(2*dim, dim, bias=False).weight

    mxu_dtype:    MXU operand / input storage dtype (bf16 fast, f32 exact parity).
    attn_h_dtype: output dtype of attn_h (default f32).
    align_dtype:  output dtype of align (default bf16 in fast mode -- halves the largest
                  HBM write stream -- f32 in parity mode).
    approx_recip: EUP approximate reciprocal for the softmax denominator.  Default False
                  because align is returned as probabilities (rows sum to 1 exactly).
    time_major=True returns the PyTorch layout [T,B,*] (costs an extra HBM transpose
    pass); time_major=False returns batch-major [B,T,*].

    NOTE: for one-step decoding (T == 1) the kernel is memory-bank-bandwidth bound;
    the bf16 bank is the only lever that matters -- batch decode steps if possible.
    """
    one_step = source.ndim == 2
    if one_step:
        source = source[:, None, :]

    B, T, D = source.shape
    _, S, _ = memory_bank.shape

    compute_dtype = jnp.dtype(mxu_dtype)
    in_itemsize = compute_dtype.itemsize
    if attn_h_dtype is None:
        attn_h_dtype = jnp.float32
    if align_dtype is None:
        align_dtype = jnp.float32 if compute_dtype == jnp.dtype(jnp.float32) else jnp.bfloat16

    # --- chip-aware sizing ----------------------------------------------------------
    vmem_cap = _vmem_capacity_bytes()
    vmem_limit = min(vmem_cap * 3 // 4, 96 * 2 ** 20)     # 48 MiB on v7x, 96 MiB on v5e/v6e
    if block_t is None:
        block_t = 128 if vmem_cap <= 64 * 2 ** 20 else 256

    d_pad = _round_up(D, 128)                 # lane-dense attn_h stores / aligned loads
    t_tile = min(_round_up(block_t, 8), _round_up(T, 8))
    t_pad = _round_up(T, t_tile)

    s_pad0 = _round_up(S, 128)                # lane-dense align stores
    if block_s is None:
        bank_budget = (vmem_limit * 2) // 5   # ~40% of the limit for the bank stream
        if 2 * s_pad0 * d_pad * in_itemsize <= bank_budget:
            block_s = s_pad0                  # whole bank resident -> fetched once per batch
        else:
            rows = bank_budget // (2 * d_pad * in_itemsize)
            block_s = max(256, (rows // 128) * 128)
    s_tile = min(_round_up(block_s, 128), s_pad0)
    s_pad = _round_up(S, s_tile)
    n_s = s_pad // s_tile

    # --- wrapper-side cast to the MXU dtype + padding (no-ops when already aligned) --
    source = source.astype(compute_dtype)
    memory_bank = memory_bank.astype(compute_dtype)
    memory_lengths = memory_lengths.astype(jnp.int32)

    if (t_pad, d_pad) != (T, D):
        source = jnp.pad(source, ((0, 0), (0, t_pad - T), (0, d_pad - D)))
    if (s_pad, d_pad) != (S, D):
        memory_bank = jnp.pad(memory_bank, ((0, 0), (0, s_pad - S), (0, d_pad - D)))

    # linear_out: y = [c, src] @ w_out.T; pack the two halves of w_out.T into one
    # [2*Dp, Dp] operand with a constant block index (fetched once, single-buffered).
    w_t = w_out.astype(jnp.float32).T          # [2D, D]
    wc, ws = w_t[:D], w_t[D:]
    if d_pad != D:
        pad = ((0, d_pad - D), (0, d_pad - D))
        wc, ws = jnp.pad(wc, pad), jnp.pad(ws, pad)
    w_packed = jnp.concatenate([wc, ws], axis=0).astype(compute_dtype)   # [2Dp, Dp]

    kernel = functools.partial(
        _global_attention_kernel, d_pad=d_pad, s_tile=s_tile, n_s=n_s,
        mxu_dtype=compute_dtype, approx_recip=approx_recip)

    grid = (B, t_pad // t_tile, n_s)

    scratch_shapes = []
    if n_s > 1:
        scratch_shapes = [
            pltpu.VMEM((t_tile, 1), jnp.float32),       # running max
            pltpu.VMEM((t_tile, 1), jnp.float32),       # running denom
            pltpu.VMEM((t_tile, d_pad), jnp.float32),   # context accumulator
            pltpu.VMEM((t_tile, s_pad), jnp.float32),   # stashed scores for align
        ]

    # Memory-bank look-ahead buffering: hide the per-batch bank DMA on 128-MiB chips
    # (v5e/v6e); skip on v7x where VMEM is the scarce resource.
    mem_buffers = 2
    if vmem_cap > 96 * 2 ** 20 and 3 * s_tile * d_pad * in_itemsize <= vmem_limit // 2:
        mem_buffers = 3
    mem_pm = mem_buffers if mem_buffers != 2 else None

    def _build_specs(use_buffered):
        def bs(shape, index_map, buffers=None):
            if use_buffered and buffers is not None:
                return pl.BlockSpec(shape, index_map, pipeline_mode=pl.Buffered(buffers))
            return pl.BlockSpec(shape, index_map)
        in_specs = [
            bs((1, t_tile, d_pad), lambda b, t, s, lens: (b, t, 0)),                 # source
            bs((1, s_tile, d_pad), lambda b, t, s, lens: (b, s, 0), buffers=mem_pm), # bank
            bs((2 * d_pad, d_pad), lambda b, t, s, lens: (0, 0), buffers=1),         # weight
        ]
        out_specs = [
            bs((1, t_tile, d_pad), lambda b, t, s, lens: (b, t, 0)),                 # attn_h
            bs((1, t_tile, s_pad), lambda b, t, s, lens: (b, t, 0)),                 # align
        ]
        return in_specs, out_specs

    def _call(use_buffered):
        in_specs, out_specs = _build_specs(use_buffered)
        grid_spec = pltpu.PrefetchScalarGridSpec(
            num_scalar_prefetch=1, grid=grid,
            in_specs=in_specs, out_specs=out_specs, scratch_shapes=scratch_shapes)
        return pl.pallas_call(
            kernel,
            out_shape=(jax.ShapeDtypeStruct((B, t_pad, d_pad), attn_h_dtype),
                       jax.ShapeDtypeStruct((B, t_pad, s_pad), align_dtype)),
            grid_spec=grid_spec,
            compiler_params=pltpu.CompilerParams(
                # B leads the parallel axes so megacore sharding preserves per-core
                # memory-bank reuse; the S axis (reduction) is "arbitrary".
                dimension_semantics=("parallel", "parallel", "arbitrary"),
                vmem_limit_bytes=int(vmem_limit)),
        )(memory_lengths, source, memory_bank, w_packed)

    try:
        attn_h_b, align_b = _call(use_buffered=True)
    except Exception:  # pragma: no cover - jax without BlockSpec(pipeline_mode=...)
        attn_h_b, align_b = _call(use_buffered=False)

    # strip padding (no-op when shapes were already aligned)
    attn_h_b = attn_h_b[:, :T, :D]
    align_b = align_b[:, :T, :S]

    if one_step:
        return attn_h_b[:, 0], align_b[:, 0]
    if time_major:
        # PyTorch return layout; costs an extra HBM pass over the two largest tensors --
        # prefer time_major=False when the downstream consumer can take batch-major.
        return jnp.transpose(attn_h_b, (1, 0, 2)), jnp.transpose(align_b, (1, 0, 2))
    return attn_h_b, align_b


def _reference(source, memory_bank, memory_lengths, w_out):
    """Pure-JAX f32 reference mirroring the PyTorch forward (attn_type='dot'), batch-major."""
    S = memory_bank.shape[1]
    scores = jnp.einsum('btd,bsd->bts', source, memory_bank)
    mask = (jnp.arange(S)[None, :] < memory_lengths[:, None])[:, None, :]   # [B,1,S]
    scores = jnp.where(mask, scores, -jnp.inf)
    align = jax.nn.softmax(scores, axis=-1)
    c = jnp.einsum('bts,bsd->btd', align, memory_bank)
    attn_h = jnp.tanh(jnp.concatenate([c, source], axis=-1) @ w_out.T)
    return attn_h, align                                                     # [B,T,D], [B,T,S]


if __name__ == "__main__":
    key = jax.random.PRNGKey(0)
    k1, k2, k3 = jax.random.split(key, 3)

    # ---- test 1: f32 exact-parity mode, PyTorch (time-major) layout ------------------
    B, T, S, D = 2, 8, 16, 32
    source = jax.random.normal(k1, (B, T, D), dtype=jnp.float32)
    memory_bank = jax.random.normal(k2, (B, S, D), dtype=jnp.float32)
    memory_lengths = jnp.array([16, 11], dtype=jnp.int32)
    bound = 1.0 / (2 * D) ** 0.5
    w_out = jax.random.uniform(k3, (D, 2 * D), minval=-bound, maxval=bound, dtype=jnp.float32)

    ref_h, ref_a = _reference(source, memory_bank, memory_lengths, w_out)

    h32, a32 = global_attention_dot(source, memory_bank, memory_lengths, w_out,
                                    mxu_dtype=jnp.float32, approx_recip=False)
    h32, a32 = jax.block_until_ready((h32, a32))
    assert h32.shape == (T, B, D) and a32.shape == (T, B, S)
    assert jnp.allclose(h32, jnp.transpose(ref_h, (1, 0, 2)), atol=1e-4, rtol=1e-4)
    assert jnp.allclose(a32, jnp.transpose(ref_a, (1, 0, 2)), atol=1e-4, rtol=1e-4)

    # ---- test 2: default fast mode (bf16 inputs/MXU, bf16 align storage), batch-major -
    h16, a16 = global_attention_dot(source, memory_bank, memory_lengths, w_out,
                                    approx_recip=True, time_major=False)
    h16, a16 = jax.block_until_ready((h16, a16))
    assert h16.shape == (B, T, D) and a16.shape == (B, T, S)
    assert jnp.allclose(h16.astype(jnp.float32), ref_h, atol=6e-2, rtol=6e-2)
    assert jnp.allclose(a16.astype(jnp.float32), ref_a, atol=6e-2, rtol=6e-2)

    # ---- test 3: ragged shapes + forced S-chunking (online-softmax path), f32 parity --
    B2, T2, S2, D2 = 3, 20, 300, 40
    k4, k5, k6 = jax.random.split(jax.random.PRNGKey(1), 3)
    src2 = jax.random.normal(k4, (B2, T2, D2), dtype=jnp.float32)
    mem2 = jax.random.normal(k5, (B2, S2, D2), dtype=jnp.float32)
    len2 = jnp.array([300, 123, 7], dtype=jnp.int32)
    bound2 = 1.0 / (2 * D2) ** 0.5
    w2 = jax.random.uniform(k6, (D2, 2 * D2), minval=-bound2, maxval=bound2, dtype=jnp.float32)

    ref_h2, ref_a2 = _reference(src2, mem2, len2, w2)
    h2, a2 = global_attention_dot(src2, mem2, len2, w2, mxu_dtype=jnp.float32,
                                  approx_recip=False, block_s=128, time_major=False)
    h2, a2 = jax.block_until_ready((h2, a2))
    assert h2.shape == (B2, T2, D2) and a2.shape == (B2, T2, S2)
    assert jnp.allclose(h2, ref_h2, atol=2e-4, rtol=2e-4)
    assert jnp.allclose(a2, ref_a2, atol=2e-4, rtol=2e-4)

    # ---- test 4: one-step decode path -------------------------------------------------
    h1, a1 = global_attention_dot(source[:, 0, :], memory_bank, memory_lengths, w_out,
                                  mxu_dtype=jnp.float32, approx_recip=False)
    h1, a1 = jax.block_until_ready((h1, a1))
    assert h1.shape == (B, D) and a1.shape == (B, S)
    assert jnp.allclose(h1, ref_h[:, 0], atol=1e-4, rtol=1e-4)
    assert jnp.allclose(a1, ref_a[:, 0], atol=1e-4, rtol=1e-4)

    print("KERNEL_OK")
</pallas_src>

<mosaic_0001>
module attributes {stable_mosaic.version = 11 : i64} {
  func.func @_global_attention_kernel(%arg0: i32, %arg1: i32, %arg2: i32, %arg3: memref<2xi32, #tpu.memory_space<smem>>, %arg4: memref<1x8x128xf32, #tpu.memory_space<vmem>>, %arg5: memref<1x128x128xf32, #tpu.memory_space<vmem>>, %arg6: memref<256x128xf32, #tpu.memory_space<vmem>>, %arg7: memref<1x8x128xf32, #tpu.memory_space<vmem>>, %arg8: memref<1x8x128xf32, #tpu.memory_space<vmem>>) attributes {dimension_semantics = [#tpu.dimension_semantics<parallel>, #tpu.dimension_semantics<parallel>, #tpu.dimension_semantics<arbitrary>], iteration_bounds = array<i64: 2, 1, 1>, scalar_prefetch = 1 : i64, scratch_operands = 0 : i64, tpu.core_type = #tpu.core_type<tc>, window_params = [{transform_indices = @transform_0, window_bounds = array<i64: 1, 8, 128>}, {transform_indices = @transform_1, window_bounds = array<i64: 1, 128, 128>}, {pipeline_mode = #tpu.pipeline_mode<synchronous>, transform_indices = @transform_2, window_bounds = array<i64: 256, 128>}, {transform_indices = @transform_3, window_bounds = array<i64: 1, 8, 128>}, {transform_indices = @transform_4, window_bounds = array<i64: 1, 8, 128>}]} {
    %0 = arith.index_cast %arg0 : i32 to index
    %1 = memref.load %arg3[%0] : memref<2xi32, #tpu.memory_space<smem>>
    %c0 = arith.constant 0 : index
    %c0_0 = arith.constant 0 : index
    %c0_1 = arith.constant 0 : index
    %2 = vector.load %arg4[%c0, %c0_0, %c0_1] : memref<1x8x128xf32, #tpu.memory_space<vmem>>, vector<1x8x128xf32>
    %3 = vector.shape_cast %2 : vector<1x8x128xf32> to vector<8x128xf32>
    %c0_2 = arith.constant 0 : index
    %c0_3 = arith.constant 0 : index
    %c0_4 = arith.constant 0 : index
    %4 = vector.load %arg5[%c0_2, %c0_3, %c0_4] : memref<1x128x128xf32, #tpu.memory_space<vmem>>, vector<1x128x128xf32>
    %5 = vector.shape_cast %4 : vector<1x128x128xf32> to vector<128x128xf32>
    %cst = arith.constant dense<0.000000e+00> : vector<8x128xf32>
    %6 = tpu.matmul %3, %5, %cst {dimension_numbers = #tpu.dot_dimension_numbers<[1], [1], [0], [0], [0, 0, 1, 0], [], []>} : vector<8x128xf32>, vector<128x128xf32>, vector<8x128xf32> -> vector<8x128xf32>
    %c128_i32 = arith.constant 128 : i32
    %7 = arith.muli %arg2, %c128_i32 : i32
    %8 = tpu.iota {dimensions = array<i32: 1>} : vector<1x128xi32>
    %9 = vector.broadcast %7 : i32 to vector<1x128xi32>
    %10 = arith.addi %9, %8 : vector<1x128xi32>
    %11 = vector.broadcast %1 : i32 to vector<1x128xi32>
    %12 = arith.cmpi slt, %10, %11 : vector<1x128xi32>
    %cst_5 = arith.constant 0.000000e+00 : f32
    %cst_6 = arith.constant -1.000000e+30 : f32
    %13 = vector.broadcast %cst_5 : f32 to vector<1x128xf32>
    %14 = vector.broadcast %cst_6 : f32 to vector<1x128xf32>
    %15 = arith.select %12, %13, %14 : vector<1x128xi1>, vector<1x128xf32>
    %16 = vector.broadcast %15 : vector<1x128xf32> to vector<8x128xf32>
    %17 = arith.addf %6, %16 : vector<8x128xf32>
    %cst_7 = arith.constant dense<0xFF800000> : vector<8xf32>
    %18 = vector.multi_reduction <maximumf>, %17, %cst_7 [1] : vector<8x128xf32> to vector<8xf32>
    %19 = vector.shape_cast %18 : vector<8xf32> to vector<8x1xf32>
    %20 = vector.broadcast %19 : vector<8x1xf32> to vector<8x128xf32>
    %21 = arith.subf %17, %20 : vector<8x128xf32>
    %22 = math.exp %21 : vector<8x128xf32>
    %cst_8 = arith.constant dense<0.000000e+00> : vector<8xf32>
    %23 = vector.multi_reduction <add>, %22, %cst_8 [1] : vector<8x128xf32> to vector<8xf32>
    %24 = vector.shape_cast %23 : vector<8xf32> to vector<8x1xf32>
    %cst_9 = arith.constant dense<0.000000e+00> : vector<8x128xf32>
    %25 = tpu.matmul %22, %5, %cst_9 {dimension_numbers = #tpu.dot_dimension_numbers<[1], [0], [0], [1], [0, 0, 1, 1], [], []>} : vector<8x128xf32>, vector<128x128xf32>, vector<8x128xf32> -> vector<8x128xf32>
    %26 = tpu.reciprocal %24 : vector<8x1xf32> -> vector<8x1xf32>
    %27 = vector.broadcast %26 : vector<8x1xf32> to vector<8x128xf32>
    %28 = arith.mulf %25, %27 : vector<8x128xf32>
    %c0_10 = arith.constant 0 : index
    %c0_11 = arith.constant 0 : index
    %29 = vector.load %arg6[%c0_10, %c0_11] : memref<256x128xf32, #tpu.memory_space<vmem>>, vector<128x128xf32>
    %c128 = arith.constant 128 : index
    %c0_12 = arith.constant 0 : index
    %30 = vector.load %arg6[%c128, %c0_12] : memref<256x128xf32, #tpu.memory_space<vmem>>, vector<128x128xf32>
    %cst_13 = arith.constant dense<0.000000e+00> : vector<8x128xf32>
    %31 = tpu.matmul %28, %29, %cst_13 {dimension_numbers = #tpu.dot_dimension_numbers<[1], [0], [0], [1], [0, 0, 1, 1], [], []>} : vector<8x128xf32>, vector<128x128xf32>, vector<8x128xf32> -> vector<8x128xf32>
    %cst_14 = arith.constant dense<0.000000e+00> : vector<8x128xf32>
    %32 = tpu.matmul %3, %30, %cst_14 {dimension_numbers = #tpu.dot_dimension_numbers<[1], [0], [0], [1], [0, 0, 1, 1], [], []>} : vector<8x128xf32>, vector<128x128xf32>, vector<8x128xf32> -> vector<8x128xf32>
    %33 = arith.addf %31, %32 : vector<8x128xf32>
    %34 = math.tanh %33 : vector<8x128xf32>
    %c0_15 = arith.constant 0 : index
    %c0_16 = arith.constant 0 : index
    %c0_17 = arith.constant 0 : index
    %35 = vector.load %arg7[%c0_15, %c0_16, %c0_17] : memref<1x8x128xf32, #tpu.memory_space<vmem>>, vector<1x8x128xf32>
    %36 = vector.shape_cast %35 : vector<1x8x128xf32> to vector<8x128xf32>
    %37 = vector.shape_cast %34 : vector<8x128xf32> to vector<1x8x128xf32>
    tpu.vector_store %arg7[%c0_15, %c0_16, %c0_17], %37 {strides = array<i32>} : memref<1x8x128xf32, #tpu.memory_space<vmem>>, vector<1x8x128xf32>,
    %38 = vector.broadcast %26 : vector<8x1xf32> to vector<8x128xf32>
    %39 = arith.mulf %22, %38 : vector<8x128xf32>
    %c0_18 = arith.constant 0 : index
    %c0_19 = arith.constant 0 : index
    %c0_20 = arith.constant 0 : index
    %40 = vector.load %arg8[%c0_18, %c0_19, %c0_20] : memref<1x8x128xf32, #tpu.memory_space<vmem>>, vector<1x8x128xf32>
    %41 = vector.shape_cast %40 : vector<1x8x128xf32> to vector<8x128xf32>
    %42 = vector.shape_cast %39 : vector<8x128xf32> to vector<1x8x128xf32>
    tpu.vector_store %arg8[%c0_18, %c0_19, %c0_20], %42 {strides = array<i32>} : memref<1x8x128xf32, #tpu.memory_space<vmem>>, vector<1x8x128xf32>,
    return
  }
  func.func @transform_0(%arg0: i32, %arg1: i32, %arg2: i32, %arg3: memref<2xi32, #tpu.memory_space<smem>>) -> (i32, i32, i32) {
    %c0_i32 = arith.constant 0 : i32
    %c0_i32_0 = arith.constant 0 : i32
    return %arg0, %arg1, %c0_i32 : i32, i32, i32
  }
  func.func @transform_1(%arg0: i32, %arg1: i32, %arg2: i32, %arg3: memref<2xi32, #tpu.memory_space<smem>>) -> (i32, i32, i32) {
    %c0_i32 = arith.constant 0 : i32
    %c0_i32_0 = arith.constant 0 : i32
    return %arg0, %arg2, %c0_i32 : i32, i32, i32
  }
  func.func @transform_2(%arg0: i32, %arg1: i32, %arg2: i32, %arg3: memref<2xi32, #tpu.memory_space<smem>>) -> (i32, i32) {
    %c0_i32 = arith.constant 0 : i32
    %c0_i32_0 = arith.constant 0 : i32
    %c0_i32_1 = arith.constant 0 : i32
    return %c0_i32, %c0_i32_0 : i32, i32
  }
  func.func @transform_3(%arg0: i32, %arg1: i32, %arg2: i32, %arg3: memref<2xi32, #tpu.memory_space<smem>>) -> (i32, i32, i32) {
    %c0_i32 = arith.constant 0 : i32
    %c0_i32_0 = arith.constant 0 : i32
    return %arg0, %arg1, %c0_i32 : i32, i32, i32
  }
  func.func @transform_4(%arg0: i32, %arg1: i32, %arg2: i32, %arg3: memref<2xi32, #tpu.memory_space<smem>>) -> (i32, i32, i32) {
    %c0_i32 = arith.constant 0 : i32
    %c0_i32_0 = arith.constant 0 : i32
    return %arg0, %arg1, %c0_i32 : i32, i32, i32
  }
}

module attributes {stable_mosaic.version = 11 : i64} {
  func.func @_global_attention_kernel(%arg0: i32, %arg1: i32, %arg2: i32, %arg3: memref<2xi32, #tpu.memory_space<smem>>, %arg4: memref<1x8x128xf32, #tpu.memory_space<vmem>>, %arg5: memref<1x128x128xf32, #tpu.memory_space<vmem>>, %arg6: memref<256x128xf32, #tpu.memory_space<vmem>>, %arg7: memref<1x8x128xf32, #tpu.memory_space<vmem>>, %arg8: memref<1x8x128xf32, #tpu.memory_space<vmem>>) attributes {dimension_semantics = [#tpu.dimension_semantics<parallel>, #tpu.dimension_semantics<parallel>, #tpu.dimension_semantics<arbitrary>], iteration_bounds = array<i64: 2, 1, 1>, scalar_prefetch = 1 : i64, scratch_operands = 0 : i64, tpu.core_type = #tpu.core_type<tc>, window_params = [{transform_indices = @transform_0, window_bounds = array<i64: 1, 8, 128>}, {transform_indices = @transform_1, window_bounds = array<i64: 1, 128, 128>}, {pipeline_mode = #tpu.pipeline_mode<synchronous>, transform_indices = @transform_2, window_bounds = array<i64: 256, 128>}, {transform_indices = @transform_3, window_bounds = array<i64: 1, 8, 128>}, {transform_indices = @transform_4, window_bounds = array<i64: 1, 8, 128>}]} {
    %0 = arith.index_cast %arg0 : i32 to index
    %1 = memref.load %arg3[%0] : memref<2xi32, #tpu.memory_space<smem>>
    %c0 = arith.constant 0 : index
    %c0_0 = arith.constant 0 : index
    %c0_1 = arith.constant 0 : index
    %2 = vector.load %arg4[%c0, %c0_0, %c0_1] : memref<1x8x128xf32, #tpu.memory_space<vmem>>, vector<1x8x128xf32>
    %3 = vector.shape_cast %2 : vector<1x8x128xf32> to vector<8x128xf32>
    %c0_2 = arith.constant 0 : index
    %c0_3 = arith.constant 0 : index
    %c0_4 = arith.constant 0 : index
    %4 = vector.load %arg5[%c0_2, %c0_3, %c0_4] : memref<1x128x128xf32, #tpu.memory_space<vmem>>, vector<1x128x128xf32>
    %5 = vector.shape_cast %4 : vector<1x128x128xf32> to vector<128x128xf32>
    %cst = arith.constant dense<0.000000e+00> : vector<8x128xf32>
    %6 = tpu.matmul %3, %5, %cst {dimension_numbers = #tpu.dot_dimension_numbers<[1], [1], [0], [0], [0, 0, 1, 0], [], []>} : vector<8x128xf32>, vector<128x128xf32>, vector<8x128xf32> -> vector<8x128xf32>
    %c128_i32 = arith.constant 128 : i32
    %7 = arith.muli %arg2, %c128_i32 : i32
    %8 = tpu.iota {dimensions = array<i32: 1>} : vector<1x128xi32>
    %9 = vector.broadcast %7 : i32 to vector<1x128xi32>
    %10 = arith.addi %9, %8 : vector<1x128xi32>
    %11 = vector.broadcast %1 : i32 to vector<1x128xi32>
    %12 = arith.cmpi slt, %10, %11 : vector<1x128xi32>
    %cst_5 = arith.constant 0.000000e+00 : f32
    %cst_6 = arith.constant -1.000000e+30 : f32
    %13 = vector.broadcast %cst_5 : f32 to vector<1x128xf32>
    %14 = vector.broadcast %cst_6 : f32 to vector<1x128xf32>
    %15 = arith.select %12, %13, %14 : vector<1x128xi1>, vector<1x128xf32>
    %16 = vector.broadcast %15 : vector<1x128xf32> to vector<8x128xf32>
    %17 = arith.addf %6, %16 : vector<8x128xf32>
    %cst_7 = arith.constant dense<0xFF800000> : vector<8xf32>
    %18 = vector.multi_reduction <maximumf>, %17, %cst_7 [1] : vector<8x128xf32> to vector<8xf32>
    %19 = vector.shape_cast %18 : vector<8xf32> to vector<8x1xf32>
    %20 = vector.broadcast %19 : vector<8x1xf32> to vector<8x128xf32>
    %21 = arith.subf %17, %20 : vector<8x128xf32>
    %22 = math.exp %21 : vector<8x128xf32>
    %cst_8 = arith.constant dense<0.000000e+00> : vector<8xf32>
    %23 = vector.multi_reduction <add>, %22, %cst_8 [1] : vector<8x128xf32> to vector<8xf32>
    %24 = vector.shape_cast %23 : vector<8xf32> to vector<8x1xf32>
    %cst_9 = arith.constant dense<0.000000e+00> : vector<8x128xf32>
    %25 = tpu.matmul %22, %5, %cst_9 {dimension_numbers = #tpu.dot_dimension_numbers<[1], [0], [0], [1], [0, 0, 1, 1], [], []>} : vector<8x128xf32>, vector<128x128xf32>, vector<8x128xf32> -> vector<8x128xf32>
    %26 = tpu.reciprocal %24 : vector<8x1xf32> -> vector<8x1xf32>
    %27 = vector.broadcast %26 : vector<8x1xf32> to vector<8x128xf32>
    %28 = arith.mulf %25, %27 : vector<8x128xf32>
    %c0_10 = arith.constant 0 : index
    %c0_11 = arith.constant 0 : index
    %29 = vector.load %arg6[%c0_10, %c0_11] : memref<256x128xf32, #tpu.memory_space<vmem>>, vector<128x128xf32>
    %c128 = arith.constant 128 : index
    %c0_12 = arith.constant 0 : index
    %30 = vector.load %arg6[%c128, %c0_12] : memref<256x128xf32, #tpu.memory_space<vmem>>, vector<128x128xf32>
    %cst_13 = arith.constant dense<0.000000e+00> : vector<8x128xf32>
    %31 = tpu.matmul %28, %29, %cst_13 {dimension_numbers = #tpu.dot_dimension_numbers<[1], [0], [0], [1], [0, 0, 1, 1], [], []>} : vector<8x128xf32>, vector<128x128xf32>, vector<8x128xf32> -> vector<8x128xf32>
    %cst_14 = arith.constant dense<0.000000e+00> : vector<8x128xf32>
    %32 = tpu.matmul %3, %30, %cst_14 {dimension_numbers = #tpu.dot_dimension_numbers<[1], [0], [0], [1], [0, 0, 1, 1], [], []>} : vector<8x128xf32>, vector<128x128xf32>, vector<8x128xf32> -> vector<8x128xf32>
    %33 = arith.addf %31, %32 : vector<8x128xf32>
    %34 = math.tanh %33 : vector<8x128xf32>
    %c0_15 = arith.constant 0 : index
    %c0_16 = arith.constant 0 : index
    %c0_17 = arith.constant 0 : index
    %35 = vector.load %arg7[%c0_15, %c0_16, %c0_17] : memref<1x8x128xf32, #tpu.memory_space<vmem>>, vector<1x8x128xf32>
    %36 = vector.shape_cast %35 : vector<1x8x128xf32> to vector<8x128xf32>
    %37 = vector.shape_cast %34 : vector<8x128xf32> to vector<1x8x128xf32>
    tpu.vector_store %arg7[%c0_15, %c0_16, %c0_17], %37 {strides = array<i32>} : memref<1x8x128xf32, #tpu.memory_space<vmem>>, vector<1x8x128xf32>,
    %38 = vector.broadcast %26 : vector<8x1xf32> to vector<8x128xf32>
    %39 = arith.mulf %22, %38 : vector<8x128xf32>
    %c0_18 = arith.constant 0 : index
    %c0_19 = arith.constant 0 : index
    %c0_20 = arith.constant 0 : index
    %40 = vector.load %arg8[%c0_18, %c0_19, %c0_20] : memref<1x8x128xf32, #tpu.memory_space<vmem>>, vector<1x8x128xf32>
    %41 = vector.shape_cast %40 : vector<1x8x128xf32> to vector<8x128xf32>
    %42 = vector.shape_cast %39 : vector<8x128xf32> to vector<1x8x128xf32>
    tpu.vector_store %arg8[%c0_18, %c0_19, %c0_20], %42 {strides = array<i32>} : memref<1x8x128xf32, #tpu.memory_space<vmem>>, vector<1x8x128xf32>,
    return
  }
  func.func @transform_0(%arg0: i32, %arg1: i32, %arg2: i32, %arg3: memref<2xi32, #tpu.memory_space<smem>>) -> (i32, i32, i32) {
    %c0_i32 = arith.constant 0 : i32
    %c0_i32_0 = arith.constant 0 : i32
    return %arg0, %arg1, %c0_i32 : i32, i32, i32
  }
  func.func @transform_1(%arg0: i32, %arg1: i32, %arg2: i32, %arg3: memref<2xi32, #tpu.memory_space<smem>>) -> (i32, i32, i32) {
    %c0_i32 = arith.constant 0 : i32
    %c0_i32_0 = arith.constant 0 : i32
    return %arg0, %arg2, %c0_i32 : i32, i32, i32
  }
  func.func @transform_2(%arg0: i32, %arg1: i32, %arg2: i32, %arg3: memref<2xi32, #tpu.memory_space<smem>>) -> (i32, i32) {
    %c0_i32 = arith.constant 0 : i32
    %c0_i32_0 = arith.constant 0 : i32
    %c0_i32_1 = arith.constant 0 : i32
    return %c0_i32, %c0_i32_0 : i32, i32
  }
  func.func @transform_3(%arg0: i32, %arg1: i32, %arg2: i32, %arg3: memref<2xi32, #tpu.memory_space<smem>>) -> (i32, i32, i32) {
    %c0_i32 = arith.constant 0 : i32
    %c0_i32_0 = arith.constant 0 : i32
    return %arg0, %arg1, %c0_i32 : i32, i32, i32
  }
  func.func @transform_4(%arg0: i32, %arg1: i32, %arg2: i32, %arg3: memref<2xi32, #tpu.memory_space<smem>>) -> (i32, i32, i32) {
    %c0_i32 = arith.constant 0 : i32
    %c0_i32_0 = arith.constant 0 : i32
    return %arg0, %arg1, %c0_i32 : i32, i32, i32
  }
}

</mosaic_0001>

<llo_original>
// kernel: tpu_custom_call.1
$region0: #{tpu_custom_call.1}
  #allocation0 [shape = 'u32[]', space=smem, size = 0x4, offset = 0x4, fixed_abs, tag = 'smem constant byte address 0x4 - core index']
  #allocation1 [shape = 'u32[72,128]{1,0:T(1,128)}', space=vmem, size = 0x9000, scoped, tag = 'internal scratch']
  #allocation2 [shape = 's32[1]{0}', space=sflag, size = 0x4, scoped, tag = 'scoped memory for tpu_custom_call.1']
  #allocation3 [shape = 'u8[512]{0}', space=smem, size = 0x200, scoped, tag = 'prefetched SMEM operand 0']
  %s0 = inlined_call_operand.hbm [shape: s32[2], index: 0, kind: input, shape index: {}]
  %s1 = inlined_call_operand.hbm [shape: f32[2,8,128], index: 1, kind: input, shape index: {}]
  %s2 = inlined_call_operand.hbm [shape: f32[2,128,128], index: 2, kind: input, shape index: {}]
  %s3 = inlined_call_operand.hbm [shape: f32[256,128], index: 3, kind: input, shape index: {}]
  %s4 = inlined_call_operand.hbm [shape: f32[2,8,128], index: 4, kind: output, shape index: {0}]
  %s5 = inlined_call_operand.hbm [shape: f32[2,8,128], index: 5, kind: output, shape index: {1}]
  %6 = xla_tuple %s4, %s5
  %s7 = sld [smem:[#allocation0]]
  $region65: #{tpu_custom_call.1} parent=0
    _
  %s9 = ssub.s32 1, %s7
  %s10 = scalar_select 0, %s9, %s7
  %s12 = sshll.u32 %s0, 4
  %s13 = int_to_ptr.hbm [resolvable:$true] %s12
  %15 = dma.hbm_to_smem %s13, 16, [#allocation3], [#allocation2]
  %17 = dma.done [#allocation2], 16
  %18 = sfence
  $region1: #{tpu_custom_call.1} parent=0
    #allocation4 [shape = 'u8[8192]{0}', space=vmem, size = 0x2000, scoped, tag = 'input window, operand 1']
    #allocation5 [shape = 's32[2]{0}', space=sflag, size = 0x8, scoped, tag = 'scoped memory for tpu_custom_call.1']
    #allocation6 [shape = 's32[2]{0}', space=sflag, size = 0x8, scoped, tag = 'scoped memory for tpu_custom_call.1']
    #allocation7 [shape = 'u8[131072]{0}', space=vmem, size = 0x20000, scoped, tag = 'input window, operand 2']
    #allocation8 [shape = 's32[2]{0}', space=sflag, size = 0x8, scoped, tag = 'scoped memory for tpu_custom_call.1']
    #allocation9 [shape = 'u8[131072]{0}', space=vmem, size = 0x20000, scoped, tag = 'input window, operand 3, single buffered']
    #allocation10 [shape = 'u8[8192]{0}', space=vmem, size = 0x2000, scoped, tag = 'output window, operand 0']
    #allocation11 [shape = 'u8[8192]{0}', space=vmem, size = 0x2000, scoped, tag = 'output window, operand 1']
    #allocation12 [shape = 's32[2]{0}', space=sflag, size = 0x8, scoped, tag = 'scoped memory for tpu_custom_call.1']
    %19 = vsyncpa [#allocation5], 0
    %s20 = scalar_lea.sflag [#allocation5], 1
    %21 = vsyncpa %s20, 0
    %22 = vsyncpa [#allocation8], 0
    %s23 = scalar_lea.sflag [#allocation8], 1
    %24 = vsyncpa %s23, 0
    %25 = vsyncpa [#allocation6], 0
    %s26 = scalar_lea.sflag [#allocation6], 1
    %27 = vsyncpa %s26, 0
    %28 = vsyncpa [#allocation12], 0
    %s29 = scalar_lea.sflag [#allocation12], 1
    %30 = vsyncpa %s29, 0
    loop: start=0, step=1, limit=4
    $region2: #{tpu_custom_call.1} parent=1 // loop_pre_header
      _
    $region3: #{tpu_custom_call.1} parent=1 // loop_header
      %s32 = sphi 0, %s36
      %p33 = scmp.ge.s32.totalorder %s32, 4
      %s39 = sphi 0, %s58
      %s40 = sphi 0, %s54
      %s41 = sphi 0, %s50
      %s42 = sphi 0, %s39
      %s43 = sphi 0, %s40
      %s44 = sphi 0, %s41
      %s45 = sphi 0, %s42
      %s46 = sphi 0, %s43
      %s47 = sphi 0, %s44
      %s63 = sphi 0, %s65
      %s66 = sphi 0, %s63
      %s67 = sphi 0, %s66
      %s83 = sphi 0, %s67
      %s91 = sphi 0, %s93
      %s94 = sphi 0, %s91
      %s95 = sphi 0, %s94
      %s111 = sphi 0, %s95
      %s115 = sphi 0, %s115
      %s117 = sphi 0, %s115
      %s118 = sphi 0, %s117
      %s132 = sphi 0, %s118
      %s140 = sphi 0, %s142
      %s143 = sphi 0, %s140
      %s144 = sphi 0, %s143
      %s160 = sphi 0, %s144
      %s168 = sphi 0, %s170
      %s171 = sphi 0, %s168
      %s172 = sphi 0, %s171
      %s188 = sphi 0, %s172
    $region4: #{tpu_custom_call.1} parent=1 // loop_header_branch
      %35 = sbr.rel (%p33) target = $region8
    $region5: #{tpu_custom_call.1} parent=1 // loop_body
      %s37 = ssub.s32 %s32, 1
      %s38 = ssub.s32 %s32, 2
      %s48 = sadd.s32 1, %s41
      %p49 = scmp.ge.s32.totalorder %s48, 1
      %s50 = scalar_select %p49, 0, %s48
      %s51 = sadd.s32 1, %s40
      %s52 = scalar_select %p49, %s51, %s40
      %p53 = scmp.ge.s32.totalorder %s52, 1
      %s54 = scalar_select %p53, 0, %s52
      %s55 = sadd.s32 1, %s39
      %s56 = scalar_select %p53, %s55, %s39
      %p57 = scmp.ge.s32.totalorder %s56, 2
      %s58 = scalar_select %p57, 0, %s56
      %s59 = ssub.s32 %s39, %s58
      %s60 = ssub.s32 %s40, %s54
      %s61 = sor.u32 %s59, %s60
      %p62 = scmp.eq.s32.totalorder %s61, 0
      %s64 = sadd.s32 %s63, 1
      %s65 = scalar_select %p62, %s63, %s64
      %p68 = pneg %p62
      %p69 = scmp.eq.s32.totalorder %s32, 1
      %p70 = por %p68, %p69
      %p71 = scmp.ne.s32.totalorder %s63, %s66
      %p72 = scmp.eq.s32.totalorder %s32, 0
      %p73 = por %p71, %p72
      %p74 = scmp.ne.s32.totalorder %s63, %s66
      %p75 = scmp.eq.s32.totalorder %s37, 1
      %p76 = por %p74, %p75
      %p77 = scmp.ne.s32.totalorder %s66, %s67
      %p78 = scmp.eq.s32.totalorder %s37, 0
      %p79 = por %p77, %p78
      %p80 = scmp.ne.s32.totalorder %s66, %s67
      %p81 = scmp.eq.s32.totalorder %s38, 1
      %p82 = por %p80, %p81
      %p84 = scmp.ne.s32.totalorder %s67, %s83
      %p85 = scmp.eq.s32.totalorder %s38, 0
      %p86 = por %p84, %p85
      %s87 = ssub.s32 %s39, %s58
      %s88 = ssub.s32 %s41, %s50
      %s89 = sor.u32 %s87, %s88
      %p90 = scmp.eq.s32.totalorder %s89, 0
      %s92 = sadd.s32 %s91, 1
      %s93 = scalar_select %p90, %s91, %s92
      %p96 = pneg %p90
      %p97 = scmp.eq.s32.totalorder %s32, 1
      %p98 = por %p96, %p97
      %p99 = scmp.ne.s32.totalorder %s91, %s94
      %p100 = scmp.eq.s32.totalorder %s32, 0
      %p101 = por %p99, %p100
      %p102 = scmp.ne.s32.totalorder %s91, %s94
      %p103 = scmp.eq.s32.totalorder %s37, 1
      %p104 = por %p102, %p103
      %p105 = scmp.ne.s32.totalorder %s94, %s95
      %p106 = scmp.eq.s32.totalorder %s37, 0
      %p107 = por %p105, %p106
      %p108 = scmp.ne.s32.totalorder %s94, %s95
      %p109 = scmp.eq.s32.totalorder %s38, 1
      %p110 = por %p108, %p109
      %p112 = scmp.ne.s32.totalorder %s95, %s111
      %p113 = scmp.eq.s32.totalorder %s38, 0
      %p114 = por %p112, %p113
      %s116 = sadd.s32 %s115, 1
      %p119 = scmp.eq.s32.totalorder %s32, 1
      %p120 = scmp.ne.s32.totalorder %s115, %s117
      %p121 = scmp.eq.s32.totalorder %s32, 0
      %p122 = por %p120, %p121
      %p123 = scmp.ne.s32.totalorder %s115, %s117
      %p124 = scmp.eq.s32.totalorder %s37, 1
      %p125 = por %p123, %p124
      %p126 = scmp.ne.s32.totalorder %s117, %s118
      %p127 = scmp.eq.s32.totalorder %s37, 0
      %p128 = por %p126, %p127
      %p129 = scmp.ne.s32.totalorder %s117, %s118
      %p130 = scmp.eq.s32.totalorder %s38, 1
      %p131 = por %p129, %p130
      %p133 = scmp.ne.s32.totalorder %s118, %s132
      %p134 = scmp.eq.s32.totalorder %s38, 0
      %p135 = por %p133, %p134
      %s136 = ssub.s32 %s39, %s58
      %s137 = ssub.s32 %s40, %s54
      %s138 = sor.u32 %s136, %s137
      %p139 = scmp.eq.s32.totalorder %s138, 0
      %s141 = sadd.s32 %s140, 1
      %s142 = scalar_select %p139, %s140, %s141
      %p145 = pneg %p139
      %p146 = scmp.eq.s32.totalorder %s32, 1
      %p147 = por %p145, %p146
      %p148 = scmp.ne.s32.totalorder %s140, %s143
      %p149 = scmp.eq.s32.totalorder %s32, 0
      %p150 = por %p148, %p149
      %p151 = scmp.ne.s32.totalorder %s140, %s143
      %p152 = scmp.eq.s32.totalorder %s37, 1
      %p153 = por %p151, %p152
      %p154 = scmp.ne.s32.totalorder %s143, %s144
      %p155 = scmp.eq.s32.totalorder %s37, 0
      %p156 = por %p154, %p155
      %p157 = scmp.ne.s32.totalorder %s143, %s144
      %p158 = scmp.eq.s32.totalorder %s38, 1
      %p159 = por %p157, %p158
      %p161 = scmp.ne.s32.totalorder %s144, %s160
      %p162 = scmp.eq.s32.totalorder %s38, 0
      %p163 = por %p161, %p162
      %s164 = ssub.s32 %s39, %s58
      %s165 = ssub.s32 %s40, %s54
      %s166 = sor.u32 %s164, %s165
      %p167 = scmp.eq.s32.totalorder %s166, 0
      %s169 = sadd.s32 %s168, 1
      %s170 = scalar_select %p167, %s168, %s169
      %p173 = pneg %p167
      %p174 = scmp.eq.s32.totalorder %s32, 1
      %p175 = por %p173, %p174
      %p176 = scmp.ne.s32.totalorder %s168, %s171
      %p177 = scmp.eq.s32.totalorder %s32, 0
      %p178 = por %p176, %p177
      %p179 = scmp.ne.s32.totalorder %s168, %s171
      %p180 = scmp.eq.s32.totalorder %s37, 1
      %p181 = por %p179, %p180
      %p182 = scmp.ne.s32.totalorder %s171, %s172
      %p183 = scmp.eq.s32.totalorder %s37, 0
      %p184 = por %p182, %p183
      %p185 = scmp.ne.s32.totalorder %s171, %s172
      %p186 = scmp.eq.s32.totalorder %s38, 1
      %p187 = por %p185, %p186
      %p189 = scmp.ne.s32.totalorder %s172, %s188
      %p190 = scmp.eq.s32.totalorder %s38, 0
      %p191 = por %p189, %p190
      %p192 = scmp.le.s32.totalorder 1, %s32
      %p193 = scmp.lt.s32.totalorder %s32, 3
      %p194 = pnand %p192, %p193
      %p195 = pneg %p194
      // Predicated region
      $region9: #{tpu_custom_call.1} parent=5 // pred_check
        _
      $region10: #{tpu_custom_call.1} parent=5 // pred_check_branch
        %197 = sbr.rel (%p194) target = $region12
      $region11: #{tpu_custom_call.1} parent=5 // pred_region
        %s198 = ssub.s32 %s32, 1
        // Predicated region
        $region13: #{tpu_custom_call.1} parent=11 // pred_check
          %p199 = pneg %p128
        $region14: #{tpu_custom_call.1} parent=11 // pred_check_branch
          %201 = sbr.rel (%p199) target = $region16
        $region15: #{tpu_custom_call.1} parent=11 // pred_region
          %203 = vsyncadd [#allocation8], 0
          %s204 = sshll.u32 %s3, 4
          %s205 = int_to_ptr.hbm [resolvable:$true] %s204
          %s206 = sshll.u32 [#allocation9], 4
          %s207 = int_to_ptr.vmem [resolvable:$true] %s206
          %212 = dma.hbm_to_vmem [thread:$0]  %s205, 4096, %s207, [#allocation8], 128, 128, 8
        $region16: #{tpu_custom_call.1} parent=11 // pred_fallthru
          _
      $region12: #{tpu_custom_call.1} parent=5 // pred_fallthru
        _
      %p213 = scmp.lt.s32.totalorder %s32, 2
      // Predicated region
      $region17: #{tpu_custom_call.1} parent=5 // pred_check
        %p214 = pneg %p213
      $region18: #{tpu_custom_call.1} parent=5 // pred_check_branch
        %216 = sbr.rel (%p214) target = $region20
      $region19: #{tpu_custom_call.1} parent=5 // pred_region
        // Predicated region
        $region21: #{tpu_custom_call.1} parent=19 // pred_check
          %p217 = pneg %p73
        $region22: #{tpu_custom_call.1} parent=19 // pred_check_branch
          %219 = sbr.rel (%p217) target = $region24
        $region23: #{tpu_custom_call.1} parent=19 // pred_region
          %s220 = sand.u32 %s63, 1
          %s221 = scalar_lea.sflag [#allocation5], %s220
          %s222 = sand.u32 %s63, 1
          %s223 = smul.addr %s222, 8
          %s224 = scalar_lea.vmem [#allocation4], %s223
          %226 = vsyncadd %s221, 0
          %s227 = sadd.s32 %s40, %s39
          %s228 = smul.addr %s227, 8
          %s229 = scalar_lea.hbm %s1, %s228
          %s231 = sshll.u32 %s229, 4
          %s232 = int_to_ptr.hbm [resolvable:$true] %s231
          %s233 = sshll.u32 %s224, 4
          %s234 = int_to_ptr.vmem [resolvable:$true] %s233
          %236 = dma.hbm_to_vmem [thread:$0]  %s232, 128, %s234, %s221
        $region24: #{tpu_custom_call.1} parent=19 // pred_fallthru
          _
        // Predicated region
        $region25: #{tpu_custom_call.1} parent=19 // pred_check
          %p237 = pneg %p101
        $region26: #{tpu_custom_call.1} parent=19 // pred_check_branch
          %239 = sbr.rel (%p237) target = $region28
        $region27: #{tpu_custom_call.1} parent=19 // pred_region
          %s240 = sand.u32 %s32, 1
          %s241 = scalar_lea.sflag [#allocation8], %s240
          %s242 = sand.u32 %s91, 1
          %s243 = smul.addr %s242, 128
          %s244 = scalar_lea.vmem [#allocation7], %s243
          %s245 = smul.u32 16, %s41
          %247 = vsyncadd %s241, 0
          %s248 = smul.addr %s39, 16
          %s249 = sadd.s32 %s245, %s248
          %s250 = smul.addr %s249, 8
          %s251 = scalar_lea.hbm %s2, %s250
          %s252 = sshll.u32 %s251, 4
          %s253 = int_to_ptr.hbm [resolvable:$true] %s252
          %s254 = sshll.u32 %s244, 4
          %s255 = int_to_ptr.vmem [resolvable:$true] %s254
          %260 = dma.hbm_to_vmem [thread:$0]  %s253, 2048, %s255, %s241, 128, 128, 8
        $region28: #{tpu_custom_call.1} parent=19 // pred_fallthru
          _
      $region20: #{tpu_custom_call.1} parent=5 // pred_fallthru
        _
      %p261 = scmp.le.s32.totalorder 1, %s32
      %p262 = scmp.lt.s32.totalorder %s32, 3
      %p263 = pnand %p261, %p262
      %p264 = pneg %p263
      // Predicated region
      $region29: #{tpu_custom_call.1} parent=5 // pred_check
        _
      $region30: #{tpu_custom_call.1} parent=5 // pred_check_branch
        %266 = sbr.rel (%p263) target = $region32
      $region31: #{tpu_custom_call.1} parent=5 // pred_region
        %s267 = ssub.s32 %s32, 1
        %s268 = sand.u32 %s66, 1
        %s269 = scalar_lea.sflag [#allocation5], %s268
        %s270 = sand.u32 %s66, 1
        %s271 = smul.addr %s270, 8
        %s272 = scalar_lea.vmem [#allocation4], %s271
        // Predicated region
        $region33: #{tpu_custom_call.1} parent=31 // pred_check
          %p273 = pneg %p79
        $region34: #{tpu_custom_call.1} parent=31 // pred_check_branch
          %275 = sbr.rel (%p273) target = $region36
        $region35: #{tpu_custom_call.1} parent=31 // pred_region
          %277 = dma.done %s269, 128
        $region36: #{tpu_custom_call.1} parent=31 // pred_fallthru
          _
        %s278 = sand.u32 %s37, 1
        %s279 = scalar_lea.sflag [#allocation8], %s278
        %s280 = sand.u32 %s94, 1
        %s281 = smul.addr %s280, 128
        %s282 = scalar_lea.vmem [#allocation7], %s281
        // Predicated region
        $region37: #{tpu_custom_call.1} parent=31 // pred_check
          %p283 = pneg %p107
        $region38: #{tpu_custom_call.1} parent=31 // pred_check_branch
          %285 = sbr.rel (%p283) target = $region40
        $region39: #{tpu_custom_call.1} parent=31 // pred_region
          %287 = dma.done %s279, 2048
        $region40: #{tpu_custom_call.1} parent=31 // pred_fallthru
          _
        // Predicated region
        $region41: #{tpu_custom_call.1} parent=31 // pred_check
          %p288 = pneg %p128
        $region42: #{tpu_custom_call.1} parent=31 // pred_check_branch
          %290 = sbr.rel (%p288) target = $region44
        $region43: #{tpu_custom_call.1} parent=31 // pred_region
          %292 = dma.done [#allocation8], 4096
        $region44: #{tpu_custom_call.1} parent=31 // pred_fallthru
          _
        %s293 = sand.u32 %s66, 1
        %s294 = scalar_lea.sflag [#allocation5], %s293
        %s295 = sand.u32 %s66, 1
        %s296 = smul.addr %s295, 8
        %s297 = scalar_lea.vmem [#allocation4], %s296
        %p298 = pneg %p79
        %p299 = pneg %p76
        %s300 = sand.u32 %s37, 1
        %s301 = scalar_lea.sflag [#allocation8], %s300
        %s302 = sand.u32 %s94, 1
        %s303 = smul.addr %s302, 128
        %s304 = scalar_lea.vmem [#allocation7], %s303
        %p305 = pneg %p107
        %p306 = pneg %p104
        %p307 = pneg %p128
        %p308 = pneg %p125
        %p309 = pneg %p156
        %p310 = pneg %p153
        %s311 = sand.u32 %s143, 1
        %s312 = scalar_lea.sflag [#allocation6], %s311
        %s313 = sand.u32 %s143, 1
        %s314 = smul.addr %s313, 8
        %s315 = scalar_lea.vmem [#allocation10], %s314
        %p316 = pneg %p184
        %p317 = pneg %p181
        %s318 = sand.u32 %s171, 1
        %s319 = scalar_lea.sflag [#allocation12], %s318
        %s320 = sand.u32 %s171, 1
        %s321 = smul.addr %s320, 8
        %s322 = scalar_lea.vmem [#allocation11], %s321
        %s323 = smul.u32 16, %s44
        %s324 = sld [smem:[#allocation3 + %s42]]
        %v325 = vld [vmem:[%s272] sm:$0xff]
        %v326 = vld [vmem:[%s282] sm:$0xff]
        %v327 = vld [vmem:[%s282 + $0x8] sm:$0xff]
        %v328 = vld [vmem:[%s282 + $0x10] sm:$0xff]
        %v329 = vld [vmem:[%s282 + $0x18] sm:$0xff]
        %v330 = vld [vmem:[%s282 + $0x20] sm:$0xff]
        %v331 = vld [vmem:[%s282 + $0x28] sm:$0xff]
        %v332 = vld [vmem:[%s282 + $0x30] sm:$0xff]
        %v333 = vld [vmem:[%s282 + $0x38] sm:$0xff]
        %v334 = vld [vmem:[%s282 + $0x40] sm:$0xff]
        %v335 = vld [vmem:[%s282 + $0x48] sm:$0xff]
        %v336 = vld [vmem:[%s282 + $0x50] sm:$0xff]
        %v337 = vld [vmem:[%s282 + $0x58] sm:$0xff]
        %v338 = vld [vmem:[%s282 + $0x60] sm:$0xff]
        %v339 = vld [vmem:[%s282 + $0x68] sm:$0xff]
        %v340 = vld [vmem:[%s282 + $0x70] sm:$0xff]
        %v341 = vld [vmem:[%s282 + $0x78] sm:$0xff]
        %s342 = smul.u32 %s44, 128
        %v343 = vlaneseq
        %v344 = vand.u32 %v343, 127
        %v345 = vstv %s342
        %v346 = vadd.s32 %v345, %v344
        %v347 = vstv %s324
        %vm348 = vcmp.lt.s32.totalorder %v346, %v347
        %v349 = vsel %vm348, 0.0, -1e+30
        %350 = vmatpush.xpose.msra.mxu0 %v341
        %351 = vmatpush.xpose.msra.mxu0 %v340
        %352 = vmatpush.xpose.msra.mxu0 %v339
        %353 = vmatpush.xpose.msra.mxu0 %v338
        %354 = vmatpush.xpose.msra.mxu0 %v337
        %355 = vmatpush.xpose.msra.mxu0 %v336
        %356 = vmatpush.xpose.msra.mxu0 %v335
        %357 = vmatpush.xpose.msra.mxu0 %v334
        %358 = vmatpush.xpose.msra.mxu0 %v333
        %359 = vmatpush.xpose.msra.mxu0 %v332
        %360 = vmatpush.xpose.msra.mxu0 %v331
        %361 = vmatpush.xpose.msra.mxu0 %v330
        %362 = vmatpush.xpose.msra.mxu0 %v329
        %363 = vmatpush.xpose.msra.mxu0 %v328
        %364 = vmatpush.xpose.msra.mxu0 %v327
        %365 = vmatpush.xpose.msra.mxu0 %v326
        %366 = vmatmul.f32.gmra.mxu0 %v325
        %v367 = vpop.f32.mrf.mxu0
        %v368 = vadd.f32 %v349, %v367
        %369 = vdwg.mxu0
        %370 = vmax.xlane.f32.xlu0 %v368
        %v371 = vpop.xlane.xlu0 %370
        %v372 = vsub.f32 %v368, %v371
        %v373 = vmul.f32 %v372, 1.442695
        %v374 = vpow.pop %v373
        %375 = vadd.xlane.f32.xlu0 %v374
        %v376 = vpop.xlane.xlu0 %375
        %377 = vmatpush.msra.mxu0 %v341
        %378 = vmatpush.msra.mxu0 %v340
        %379 = vmatpush.msra.mxu0 %v339
        %380 = vmatpush.msra.mxu0 %v338
        %381 = vmatpush.msra.mxu0 %v337
        %382 = vmatpush.msra.mxu0 %v336
        %383 = vmatpush.msra.mxu0 %v335
        %384 = vmatpush.msra.mxu0 %v334
        %385 = vmatpush.msra.mxu0 %v333
        %386 = vmatpush.msra.mxu0 %v332
        %387 = vmatpush.msra.mxu0 %v331
        %388 = vmatpush.msra.mxu0 %v330
        %389 = vmatpush.msra.mxu0 %v329
        %390 = vmatpush.msra.mxu0 %v328
        %391 = vmatpush.msra.mxu0 %v327
        %392 = vmatpush.msra.mxu0 %v326
        %393 = vmatmul.f32.gmra.mxu0 %v374
        %v394 = vpop.f32.mrf.mxu0
        %v395 = vadd.f32 0.0, %v394
        %396 = vdwg.mxu0
        %v397 = vrcp.pop %v376
        %v398 = vmul.f32 %v376, %v397
        %v399 = vsub.f32 1.0, %v398
        %v400 = vmul.f32 %v397, %v399
        %v401 = vadd.f32 %v397, %v400
        %vm402 = vweird.f32 %v376
        %vm403 = vweird.f32 %v397
        %vm404 = vmor %vm402, %vm403
        %v405 = vsel %vm404, %v397, %v401
        %v406 = vand.u32 2147483647, %v376
        %vm407 = vcmp.eq.f32.partialorder %v406, 8.507059e+37
        %v408 = vand.u32 %v376, 2147483648
        %v409 = vor.u32 1.1754944e-38, %v408
        %v410 = vsel %vm407, %v409, %v405
        %v411 = vmul.f32 %v395, %v410
        %v412 = vld [vmem:[#allocation9] sm:$0xff]
        %v413 = vld [vmem:[#allocation9 + $0x8] sm:$0xff]
        %v414 = vld [vmem:[#allocation9 + $0x10] sm:$0xff]
        %v415 = vld [vmem:[#allocation9 + $0x18] sm:$0xff]
        %v416 = vld [vmem:[#allocation9 + $0x20] sm:$0xff]
        %v417 = vld [vmem:[#allocation9 + $0x28] sm:$0xff]
        %v418 = vld [vmem:[#allocation9 + $0x30] sm:$0xff]
        %v419 = vld [vmem:[#allocation9 + $0x38] sm:$0xff]
        %v420 = vld [vmem:[#allocation9 + $0x40] sm:$0xff]
        %v421 = vld [vmem:[#allocation9 + $0x48] sm:$0xff]
        %v422 = vld [vmem:[#allocation9 + $0x50] sm:$0xff]
        %v423 = vld [vmem:[#allocation9 + $0x58] sm:$0xff]
        %v424 = vld [vmem:[#allocation9 + $0x60] sm:$0xff]
        %v425 = vld [vmem:[#allocation9 + $0x68] sm:$0xff]
        %v426 = vld [vmem:[#allocation9 + $0x70] sm:$0xff]
        %v427 = vld [vmem:[#allocation9 + $0x78] sm:$0xff]
        %v428 = vld [vmem:[#allocation9 + $0x80] sm:$0xff]
        %v429 = vld [vmem:[#allocation9 + $0x88] sm:$0xff]
        %v430 = vld [vmem:[#allocation9 + $0x90] sm:$0xff]
        %v431 = vld [vmem:[#allocation9 + $0x98] sm:$0xff]
        %v432 = vld [vmem:[#allocation9 + $0xa0] sm:$0xff]
        %v433 = vld [vmem:[#allocation9 + $0xa8] sm:$0xff]
        %v434 = vld [vmem:[#allocation9 + $0xb0] sm:$0xff]
        %v435 = vld [vmem:[#allocation9 + $0xb8] sm:$0xff]
        %v436 = vld [vmem:[#allocation9 + $0xc0] sm:$0xff]
        %v437 = vld [vmem:[#allocation9 + $0xc8] sm:$0xff]
        %v438 = vld [vmem:[#allocation9 + $0xd0] sm:$0xff]
        %v439 = vld [vmem:[#allocation9 + $0xd8] sm:$0xff]
        %v440 = vld [vmem:[#allocation9 + $0xe0] sm:$0xff]
        %v441 = vld [vmem:[#allocation9 + $0xe8] sm:$0xff]
        %v442 = vld [vmem:[#allocation9 + $0xf0] sm:$0xff]
        %v443 = vld [vmem:[#allocation9 + $0xf8] sm:$0xff]
        %444 = vmatpush.msra.mxu0 %v443
        %445 = vmatpush.msra.mxu0 %v442
        %446 = vmatpush.msra.mxu0 %v441
        %447 = vmatpush.msra.mxu0 %v440
        %448 = vmatpush.msra.mxu0 %v439
        %449 = vmatpush.msra.mxu0 %v438
        %450 = vmatpush.msra.mxu0 %v437
        %451 = vmatpush.msra.mxu0 %v436
        %452 = vmatpush.msra.mxu0 %v435
        %453 = vmatpush.msra.mxu0 %v434
        %454 = vmatpush.msra.mxu0 %v433
        %455 = vmatpush.msra.mxu0 %v432
        %456 = vmatpush.msra.mxu0 %v431
        %457 = vmatpush.msra.mxu0 %v430
        %458 = vmatpush.msra.mxu0 %v429
        %459 = vmatpush.msra.mxu0 %v428
        %460 = vmatmul.f32.gmra.mxu0 %v325
        %v461 = vpop.f32.mrf.mxu0
        %v462 = vadd.f32 0.0, %v461
        %463 = vdwg.mxu0
        %464 = vmatpush.msra.mxu0 %v427
        %465 = vmatpush.msra.mxu0 %v426
        %466 = vmatpush.msra.mxu0 %v425
        %467 = vmatpush.msra.mxu0 %v424
        %468 = vmatpush.msra.mxu0 %v423
        %469 = vmatpush.msra.mxu0 %v422
        %470 = vmatpush.msra.mxu0 %v421
        %471 = vmatpush.msra.mxu0 %v420
        %472 = vmatpush.msra.mxu0 %v419
        %473 = vmatpush.msra.mxu0 %v418
        %474 = vmatpush.msra.mxu0 %v417
        %475 = vmatpush.msra.mxu0 %v416
        %476 = vmatpush.msra.mxu0 %v415
        %477 = vmatpush.msra.mxu0 %v414
        %478 = vmatpush.msra.mxu0 %v413
        %479 = vmatpush.msra.mxu0 %v412
        %480 = vmatmul.f32.gmra.mxu0 %v411
        %v481 = vpop.f32.mrf.mxu0
        %v482 = vadd.f32 %v462, %v481
        %483 = vdwg.mxu0
        %v484 = vtanh.pop %v482
        %485 = vst [vmem:[%s315] sm:$0xff] %v484
        %v486 = vmul.f32 %v374, %v410
        %487 = vst [vmem:[%s322] sm:$0xff] %v486
        %s488 = sand.u32 %s143, 1
        %s489 = scalar_lea.sflag [#allocation6], %s488
        %s490 = sand.u32 %s143, 1
        %s491 = smul.addr %s490, 8
        %s492 = scalar_lea.vmem [#allocation10], %s491
        %s493 = sand.u32 %s171, 1
        %s494 = scalar_lea.sflag [#allocation12], %s493
        %s495 = sand.u32 %s171, 1
        %s496 = smul.addr %s495, 8
        %s497 = scalar_lea.vmem [#allocation11], %s496
        // Predicated region
        $region45: #{tpu_custom_call.1} parent=31 // pred_check
          %p498 = pneg %p153
        $region46: #{tpu_custom_call.1} parent=31 // pred_check_branch
          %500 = sbr.rel (%p498) target = $region48
        $region47: #{tpu_custom_call.1} parent=31 // pred_region
          %502 = vsyncadd %s489, 0
          %s503 = sadd.s32 %s43, %s42
          %s504 = smul.addr %s503, 8
          %s505 = scalar_lea.hbm %s4, %s504
          %s507 = sshll.u32 %s492, 4
          %s508 = int_to_ptr.vmem [resolvable:$true] %s507
          %s509 = sshll.u32 %s505, 4
          %s510 = int_to_ptr.hbm [resolvable:$true] %s509
          %512 = dma.vmem_to_hbm [thread:$0]  %s508, 128, %s510, %s489
        $region48: #{tpu_custom_call.1} parent=31 // pred_fallthru
          _
        // Predicated region
        $region49: #{tpu_custom_call.1} parent=31 // pred_check
          %p513 = pneg %p181
        $region50: #{tpu_custom_call.1} parent=31 // pred_check_branch
          %515 = sbr.rel (%p513) target = $region52
        $region51: #{tpu_custom_call.1} parent=31 // pred_region
          %517 = vsyncadd %s494, 0
          %s518 = sadd.s32 %s43, %s42
          %s519 = smul.addr %s518, 8
          %s520 = scalar_lea.hbm %s5, %s519
          %s522 = sshll.u32 %s497, 4
          %s523 = int_to_ptr.vmem [resolvable:$true] %s522
          %s524 = sshll.u32 %s520, 4
          %s525 = int_to_ptr.hbm [resolvable:$true] %s524
          %527 = dma.vmem_to_hbm [thread:$0]  %s523, 128, %s525, %s494
        $region52: #{tpu_custom_call.1} parent=31 // pred_fallthru
          _
      $region32: #{tpu_custom_call.1} parent=5 // pred_fallthru
        _
      %p528 = scmp.le.s32.totalorder 2, %s32
      // Predicated region
      $region53: #{tpu_custom_call.1} parent=5 // pred_check
        %p529 = pneg %p528
      $region54: #{tpu_custom_call.1} parent=5 // pred_check_branch
        %531 = sbr.rel (%p529) target = $region56
      $region55: #{tpu_custom_call.1} parent=5 // pred_region
        %s532 = ssub.s32 %s32, 2
        // Predicated region
        $region57: #{tpu_custom_call.1} parent=55 // pred_check
          %p533 = pneg %p159
        $region58: #{tpu_custom_call.1} parent=55 // pred_check_branch
          %535 = sbr.rel (%p533) target = $region60
        $region59: #{tpu_custom_call.1} parent=55 // pred_region
          %s536 = sand.u32 %s144, 1
          %s537 = scalar_lea.sflag [#allocation6], %s536
          %s538 = sand.u32 %s144, 1
          %s539 = smul.addr %s538, 8
          %s540 = scalar_lea.vmem [#allocation10], %s539
          %542 = dma.done %s537, 128
        $region60: #{tpu_custom_call.1} parent=55 // pred_fallthru
          _
        // Predicated region
        $region61: #{tpu_custom_call.1} parent=55 // pred_check
          %p543 = pneg %p187
        $region62: #{tpu_custom_call.1} parent=55 // pred_check_branch
          %545 = sbr.rel (%p543) target = $region64
        $region63: #{tpu_custom_call.1} parent=55 // pred_region
          %s546 = sand.u32 %s172, 1
          %s547 = scalar_lea.sflag [#allocation12], %s546
          %s548 = sand.u32 %s172, 1
          %s549 = smul.addr %s548, 8
          %s550 = scalar_lea.vmem [#allocation11], %s549
          %552 = dma.done %s547, 128
        $region64: #{tpu_custom_call.1} parent=55 // pred_fallthru
          _
      $region56: #{tpu_custom_call.1} parent=5 // pred_fallthru
        _
    $region6: #{tpu_custom_call.1} parent=1 // loop_footer
      %s36 = sadd.s32 1, %s32
    $region7: #{tpu_custom_call.1} parent=1 // loop_footer_branch
      %31 = sbr.rel target = $region3
    $region8: #{tpu_custom_call.1} parent=1 // loop_exit
      _
    %553 = vsyncpa [#allocation5], 1
    %s554 = scalar_lea.sflag [#allocation5], 1
    %555 = vsyncpa %s554, 1
    %556 = vsyncpa [#allocation8], 1
    %s557 = scalar_lea.sflag [#allocation8], 1
    %558 = vsyncpa %s557, 1
    %559 = vsyncpa [#allocation6], 1
    %s560 = scalar_lea.sflag [#allocation6], 1
    %561 = vsyncpa %s560, 1
    %562 = vsyncpa [#allocation12], 1
    %s563 = scalar_lea.sflag [#allocation12], 1
    %564 = vsyncpa %s563, 1

// kernel: tpu_custom_call.1
$region0: #{tpu_custom_call.1}
  #allocation0 [shape = 'u32[]', space=smem, size = 0x4, offset = 0x4, fixed_abs, tag = 'smem constant byte address 0x4 - core index']
  #allocation1 [shape = 'u32[72,128]{1,0:T(1,128)}', space=vmem, size = 0x9000, scoped, tag = 'internal scratch']
  #allocation2 [shape = 's32[1]{0}', space=sflag, size = 0x4, scoped, tag = 'scoped memory for tpu_custom_call.1']
  #allocation3 [shape = 'u8[512]{0}', space=smem, size = 0x200, scoped, tag = 'prefetched SMEM operand 0']
  %s0 = inlined_call_operand.hbm [shape: s32[2], index: 0, kind: input, shape index: {}]
  %s1 = inlined_call_operand.hbm [shape: f32[2,8,128], index: 1, kind: input, shape index: {}]
  %s2 = inlined_call_operand.hbm [shape: f32[2,128,128], index: 2, kind: input, shape index: {}]
  %s3 = inlined_call_operand.hbm [shape: f32[256,128], index: 3, kind: input, shape index: {}]
  %s4 = inlined_call_operand.hbm [shape: f32[2,8,128], index: 4, kind: output, shape index: {0}]
  %s5 = inlined_call_operand.hbm [shape: f32[2,8,128], index: 5, kind: output, shape index: {1}]
  %6 = xla_tuple %s4, %s5
  %s7 = sld [smem:[#allocation0]]
  $region65: #{tpu_custom_call.1} parent=0
    _
  %s9 = ssub.s32 1, %s7
  %s10 = scalar_select 0, %s9, %s7
  %s12 = sshll.u32 %s0, 4
  %s13 = int_to_ptr.hbm [resolvable:$true] %s12
  %15 = dma.hbm_to_smem %s13, 16, [#allocation3], [#allocation2]
  %17 = dma.done [#allocation2], 16
  %18 = sfence
  $region1: #{tpu_custom_call.1} parent=0
    #allocation4 [shape = 'u8[8192]{0}', space=vmem, size = 0x2000, scoped, tag = 'input window, operand 1']
    #allocation5 [shape = 's32[2]{0}', space=sflag, size = 0x8, scoped, tag = 'scoped memory for tpu_custom_call.1']
    #allocation6 [shape = 's32[2]{0}', space=sflag, size = 0x8, scoped, tag = 'scoped memory for tpu_custom_call.1']
    #allocation7 [shape = 'u8[131072]{0}', space=vmem, size = 0x20000, scoped, tag = 'input window, operand 2']
    #allocation8 [shape = 's32[2]{0}', space=sflag, size = 0x8, scoped, tag = 'scoped memory for tpu_custom_call.1']
    #allocation9 [shape = 'u8[131072]{0}', space=vmem, size = 0x20000, scoped, tag = 'input window, operand 3, single buffered']
    #allocation10 [shape = 'u8[8192]{0}', space=vmem, size = 0x2000, scoped, tag = 'output window, operand 0']
    #allocation11 [shape = 'u8[8192]{0}', space=vmem, size = 0x2000, scoped, tag = 'output window, operand 1']
    #allocation12 [shape = 's32[2]{0}', space=sflag, size = 0x8, scoped, tag = 'scoped memory for tpu_custom_call.1']
    %19 = vsyncpa [#allocation5], 0
    %s20 = scalar_lea.sflag [#allocation5], 1
    %21 = vsyncpa %s20, 0
    %22 = vsyncpa [#allocation8], 0
    %s23 = scalar_lea.sflag [#allocation8], 1
    %24 = vsyncpa %s23, 0
    %25 = vsyncpa [#allocation6], 0
    %s26 = scalar_lea.sflag [#allocation6], 1
    %27 = vsyncpa %s26, 0
    %28 = vsyncpa [#allocation12], 0
    %s29 = scalar_lea.sflag [#allocation12], 1
    %30 = vsyncpa %s29, 0
    loop: start=0, step=1, limit=4
    $region2: #{tpu_custom_call.1} parent=1 // loop_pre_header
      _
    $region3: #{tpu_custom_call.1} parent=1 // loop_header
      %s32 = sphi 0, %s36
      %p33 = scmp.ge.s32.totalorder %s32, 4
      %s39 = sphi 0, %s58
      %s40 = sphi 0, %s54
      %s41 = sphi 0, %s50
      %s42 = sphi 0, %s39
      %s43 = sphi 0, %s40
      %s44 = sphi 0, %s41
      %s45 = sphi 0, %s42
      %s46 = sphi 0, %s43
      %s47 = sphi 0, %s44
      %s63 = sphi 0, %s65
      %s66 = sphi 0, %s63
      %s67 = sphi 0, %s66
      %s83 = sphi 0, %s67
      %s91 = sphi 0, %s93
      %s94 = sphi 0, %s91
      %s95 = sphi 0, %s94
      %s111 = sphi 0, %s95
      %s115 = sphi 0, %s115
      %s117 = sphi 0, %s115
      %s118 = sphi 0, %s117
      %s132 = sphi 0, %s118
      %s140 = sphi 0, %s142
      %s143 = sphi 0, %s140
      %s144 = sphi 0, %s143
      %s160 = sphi 0, %s144
      %s168 = sphi 0, %s170
      %s171 = sphi 0, %s168
      %s172 = sphi 0, %s171
      %s188 = sphi 0, %s172
    $region4: #{tpu_custom_call.1} parent=1 // loop_header_branch
      %35 = sbr.rel (%p33) target = $region8
    $region5: #{tpu_custom_call.1} parent=1 // loop_body
      %s37 = ssub.s32 %s32, 1
      %s38 = ssub.s32 %s32, 2
      %s48 = sadd.s32 1, %s41
      %p49 = scmp.ge.s32.totalorder %s48, 1
      %s50 = scalar_select %p49, 0, %s48
      %s51 = sadd.s32 1, %s40
      %s52 = scalar_select %p49, %s51, %s40
      %p53 = scmp.ge.s32.totalorder %s52, 1
      %s54 = scalar_select %p53, 0, %s52
      %s55 = sadd.s32 1, %s39
      %s56 = scalar_select %p53, %s55, %s39
      %p57 = scmp.ge.s32.totalorder %s56, 2
      %s58 = scalar_select %p57, 0, %s56
      %s59 = ssub.s32 %s39, %s58
      %s60 = ssub.s32 %s40, %s54
      %s61 = sor.u32 %s59, %s60
      %p62 = scmp.eq.s32.totalorder %s61, 0
      %s64 = sadd.s32 %s63, 1
      %s65 = scalar_select %p62, %s63, %s64
      %p68 = pneg %p62
      %p69 = scmp.eq.s32.totalorder %s32, 1
      %p70 = por %p68, %p69
      %p71 = scmp.ne.s32.totalorder %s63, %s66
      %p72 = scmp.eq.s32.totalorder %s32, 0
      %p73 = por %p71, %p72
      %p74 = scmp.ne.s32.totalorder %s63, %s66
      %p75 = scmp.eq.s32.totalorder %s37, 1
      %p76 = por %p74, %p75
      %p77 = scmp.ne.s32.totalorder %s66, %s67
      %p78 = scmp.eq.s32.totalorder %s37, 0
      %p79 = por %p77, %p78
      %p80 = scmp.ne.s32.totalorder %s66, %s67
      %p81 = scmp.eq.s32.totalorder %s38, 1
      %p82 = por %p80, %p81
      %p84 = scmp.ne.s32.totalorder %s67, %s83
      %p85 = scmp.eq.s32.totalorder %s38, 0
      %p86 = por %p84, %p85
      %s87 = ssub.s32 %s39, %s58
      %s88 = ssub.s32 %s41, %s50
      %s89 = sor.u32 %s87, %s88
      %p90 = scmp.eq.s32.totalorder %s89, 0
      %s92 = sadd.s32 %s91, 1
      %s93 = scalar_select %p90, %s91, %s92
      %p96 = pneg %p90
      %p97 = scmp.eq.s32.totalorder %s32, 1
      %p98 = por %p96, %p97
      %p99 = scmp.ne.s32.totalorder %s91, %s94
      %p100 = scmp.eq.s32.totalorder %s32, 0
      %p101 = por %p99, %p100
      %p102 = scmp.ne.s32.totalorder %s91, %s94
      %p103 = scmp.eq.s32.totalorder %s37, 1
      %p104 = por %p102, %p103
      %p105 = scmp.ne.s32.totalorder %s94, %s95
      %p106 = scmp.eq.s32.totalorder %s37, 0
      %p107 = por %p105, %p106
      %p108 = scmp.ne.s32.totalorder %s94, %s95
      %p109 = scmp.eq.s32.totalorder %s38, 1
      %p110 = por %p108, %p109
      %p112 = scmp.ne.s32.totalorder %s95, %s111
      %p113 = scmp.eq.s32.totalorder %s38, 0
      %p114 = por %p112, %p113
      %s116 = sadd.s32 %s115, 1
      %p119 = scmp.eq.s32.totalorder %s32, 1
      %p120 = scmp.ne.s32.totalorder %s115, %s117
      %p121 = scmp.eq.s32.totalorder %s32, 0
      %p122 = por %p120, %p121
      %p123 = scmp.ne.s32.totalorder %s115, %s117
      %p124 = scmp.eq.s32.totalorder %s37, 1
      %p125 = por %p123, %p124
      %p126 = scmp.ne.s32.totalorder %s117, %s118
      %p127 = scmp.eq.s32.totalorder %s37, 0
      %p128 = por %p126, %p127
      %p129 = scmp.ne.s32.totalorder %s117, %s118
      %p130 = scmp.eq.s32.totalorder %s38, 1
      %p131 = por %p129, %p130
      %p133 = scmp.ne.s32.totalorder %s118, %s132
      %p134 = scmp.eq.s32.totalorder %s38, 0
      %p135 = por %p133, %p134
      %s136 = ssub.s32 %s39, %s58
      %s137 = ssub.s32 %s40, %s54
      %s138 = sor.u32 %s136, %s137
      %p139 = scmp.eq.s32.totalorder %s138, 0
      %s141 = sadd.s32 %s140, 1
      %s142 = scalar_select %p139, %s140, %s141
      %p145 = pneg %p139
      %p146 = scmp.eq.s32.totalorder %s32, 1
      %p147 = por %p145, %p146
      %p148 = scmp.ne.s32.totalorder %s140, %s143
      %p149 = scmp.eq.s32.totalorder %s32, 0
      %p150 = por %p148, %p149
      %p151 = scmp.ne.s32.totalorder %s140, %s143
      %p152 = scmp.eq.s32.totalorder %s37, 1
      %p153 = por %p151, %p152
      %p154 = scmp.ne.s32.totalorder %s143, %s144
      %p155 = scmp.eq.s32.totalorder %s37, 0
      %p156 = por %p154, %p155
      %p157 = scmp.ne.s32.totalorder %s143, %s144
      %p158 = scmp.eq.s32.totalorder %s38, 1
      %p159 = por %p157, %p158
      %p161 = scmp.ne.s32.totalorder %s144, %s160
      %p162 = scmp.eq.s32.totalorder %s38, 0
      %p163 = por %p161, %p162
      %s164 = ssub.s32 %s39, %s58
      %s165 = ssub.s32 %s40, %s54
      %s166 = sor.u32 %s164, %s165
      %p167 = scmp.eq.s32.totalorder %s166, 0
      %s169 = sadd.s32 %s168, 1
      %s170 = scalar_select %p167, %s168, %s169
      %p173 = pneg %p167
      %p174 = scmp.eq.s32.totalorder %s32, 1
      %p175 = por %p173, %p174
      %p176 = scmp.ne.s32.totalorder %s168, %s171
      %p177 = scmp.eq.s32.totalorder %s32, 0
      %p178 = por %p176, %p177
      %p179 = scmp.ne.s32.totalorder %s168, %s171
      %p180 = scmp.eq.s32.totalorder %s37, 1
      %p181 = por %p179, %p180
      %p182 = scmp.ne.s32.totalorder %s171, %s172
      %p183 = scmp.eq.s32.totalorder %s37, 0
      %p184 = por %p182, %p183
      %p185 = scmp.ne.s32.totalorder %s171, %s172
      %p186 = scmp.eq.s32.totalorder %s38, 1
      %p187 = por %p185, %p186
      %p189 = scmp.ne.s32.totalorder %s172, %s188
      %p190 = scmp.eq.s32.totalorder %s38, 0
      %p191 = por %p189, %p190
      %p192 = scmp.le.s32.totalorder 1, %s32
      %p193 = scmp.lt.s32.totalorder %s32, 3
      %p194 = pnand %p192, %p193
      %p195 = pneg %p194
      // Predicated region
      $region9: #{tpu_custom_call.1} parent=5 // pred_check
        _
      $region10: #{tpu_custom_call.1} parent=5 // pred_check_branch
        %197 = sbr.rel (%p194) target = $region12
      $region11: #{tpu_custom_call.1} parent=5 // pred_region
        %s198 = ssub.s32 %s32, 1
        // Predicated region
        $region13: #{tpu_custom_call.1} parent=11 // pred_check
          %p199 = pneg %p128
        $region14: #{tpu_custom_call.1} parent=11 // pred_check_branch
          %201 = sbr.rel (%p199) target = $region16
        $region15: #{tpu_custom_call.1} parent=11 // pred_region
          %203 = vsyncadd [#allocation8], 0
          %s204 = sshll.u32 %s3, 4
          %s205 = int_to_ptr.hbm [resolvable:$true] %s204
          %s206 = sshll.u32 [#allocation9], 4
          %s207 = int_to_ptr.vmem [resolvable:$true] %s206
          %212 = dma.hbm_to_vmem [thread:$0]  %s205, 4096, %s207, [#allocation8], 128, 128, 8
        $region16: #{tpu_custom_call.1} parent=11 // pred_fallthru
          _
      $region12: #{tpu_custom_call.1} parent=5 // pred_fallthru
        _
      %p213 = scmp.lt.s32.totalorder %s32, 2
      // Predicated region
      $region17: #{tpu_custom_call.1} parent=5 // pred_check
        %p214 = pneg %p213
      $region18: #{tpu_custom_call.1} parent=5 // pred_check_branch
        %216 = sbr.rel (%p214) target = $region20
      $region19: #{tpu_custom_call.1} parent=5 // pred_region
        // Predicated region
        $region21: #{tpu_custom_call.1} parent=19 // pred_check
          %p217 = pneg %p73
        $region22: #{tpu_custom_call.1} parent=19 // pred_check_branch
          %219 = sbr.rel (%p217) target = $region24
        $region23: #{tpu_custom_call.1} parent=19 // pred_region
          %s220 = sand.u32 %s63, 1
          %s221 = scalar_lea.sflag [#allocation5], %s220
          %s222 = sand.u32 %s63, 1
          %s223 = smul.addr %s222, 8
          %s224 = scalar_lea.vmem [#allocation4], %s223
          %226 = vsyncadd %s221, 0
          %s227 = sadd.s32 %s40, %s39
          %s228 = smul.addr %s227, 8
          %s229 = scalar_lea.hbm %s1, %s228
          %s231 = sshll.u32 %s229, 4
          %s232 = int_to_ptr.hbm [resolvable:$true] %s231
          %s233 = sshll.u32 %s224, 4
          %s234 = int_to_ptr.vmem [resolvable:$true] %s233
          %236 = dma.hbm_to_vmem [thread:$0]  %s232, 128, %s234, %s221
        $region24: #{tpu_custom_call.1} parent=19 // pred_fallthru
          _
        // Predicated region
        $region25: #{tpu_custom_call.1} parent=19 // pred_check
          %p237 = pneg %p101
        $region26: #{tpu_custom_call.1} parent=19 // pred_check_branch
          %239 = sbr.rel (%p237) target = $region28
        $region27: #{tpu_custom_call.1} parent=19 // pred_region
          %s240 = sand.u32 %s32, 1
          %s241 = scalar_lea.sflag [#allocation8], %s240
          %s242 = sand.u32 %s91, 1
          %s243 = smul.addr %s242, 128
          %s244 = scalar_lea.vmem [#allocation7], %s243
          %s245 = smul.u32 16, %s41
          %247 = vsyncadd %s241, 0
          %s248 = smul.addr %s39, 16
          %s249 = sadd.s32 %s245, %s248
          %s250 = smul.addr %s249, 8
          %s251 = scalar_lea.hbm %s2, %s250
          %s252 = sshll.u32 %s251, 4
          %s253 = int_to_ptr.hbm [resolvable:$true] %s252
          %s254 = sshll.u32 %s244, 4
          %s255 = int_to_ptr.vmem [resolvable:$true] %s254
          %260 = dma.hbm_to_vmem [thread:$0]  %s253, 2048, %s255, %s241, 128, 128, 8
        $region28: #{tpu_custom_call.1} parent=19 // pred_fallthru
          _
      $region20: #{tpu_custom_call.1} parent=5 // pred_fallthru
        _
      %p261 = scmp.le.s32.totalorder 1, %s32
      %p262 = scmp.lt.s32.totalorder %s32, 3
      %p263 = pnand %p261, %p262
      %p264 = pneg %p263
      // Predicated region
      $region29: #{tpu_custom_call.1} parent=5 // pred_check
        _
      $region30: #{tpu_custom_call.1} parent=5 // pred_check_branch
        %266 = sbr.rel (%p263) target = $region32
      $region31: #{tpu_custom_call.1} parent=5 // pred_region
        %s267 = ssub.s32 %s32, 1
        %s268 = sand.u32 %s66, 1
        %s269 = scalar_lea.sflag [#allocation5], %s268
        %s270 = sand.u32 %s66, 1
        %s271 = smul.addr %s270, 8
        %s272 = scalar_lea.vmem [#allocation4], %s271
        // Predicated region
        $region33: #{tpu_custom_call.1} parent=31 // pred_check
          %p273 = pneg %p79
        $region34: #{tpu_custom_call.1} parent=31 // pred_check_branch
          %275 = sbr.rel (%p273) target = $region36
        $region35: #{tpu_custom_call.1} parent=31 // pred_region
          %277 = dma.done %s269, 128
        $region36: #{tpu_custom_call.1} parent=31 // pred_fallthru
          _
        %s278 = sand.u32 %s37, 1
        %s279 = scalar_lea.sflag [#allocation8], %s278
        %s280 = sand.u32 %s94, 1
        %s281 = smul.addr %s280, 128
        %s282 = scalar_lea.vmem [#allocation7], %s281
        // Predicated region
        $region37: #{tpu_custom_call.1} parent=31 // pred_check
          %p283 = pneg %p107
        $region38: #{tpu_custom_call.1} parent=31 // pred_check_branch
          %285 = sbr.rel (%p283) target = $region40
        $region39: #{tpu_custom_call.1} parent=31 // pred_region
          %287 = dma.done %s279, 2048
        $region40: #{tpu_custom_call.1} parent=31 // pred_fallthru
          _
        // Predicated region
        $region41: #{tpu_custom_call.1} parent=31 // pred_check
          %p288 = pneg %p128
        $region42: #{tpu_custom_call.1} parent=31 // pred_check_branch
          %290 = sbr.rel (%p288) target = $region44
        $region43: #{tpu_custom_call.1} parent=31 // pred_region
          %292 = dma.done [#allocation8], 4096
        $region44: #{tpu_custom_call.1} parent=31 // pred_fallthru
          _
        %s293 = sand.u32 %s66, 1
        %s294 = scalar_lea.sflag [#allocation5], %s293
        %s295 = sand.u32 %s66, 1
        %s296 = smul.addr %s295, 8
        %s297 = scalar_lea.vmem [#allocation4], %s296
        %p298 = pneg %p79
        %p299 = pneg %p76
        %s300 = sand.u32 %s37, 1
        %s301 = scalar_lea.sflag [#allocation8], %s300
        %s302 = sand.u32 %s94, 1
        %s303 = smul.addr %s302, 128
        %s304 = scalar_lea.vmem [#allocation7], %s303
        %p305 = pneg %p107
        %p306 = pneg %p104
        %p307 = pneg %p128
        %p308 = pneg %p125
        %p309 = pneg %p156
        %p310 = pneg %p153
        %s311 = sand.u32 %s143, 1
        %s312 = scalar_lea.sflag [#allocation6], %s311
        %s313 = sand.u32 %s143, 1
        %s314 = smul.addr %s313, 8
        %s315 = scalar_lea.vmem [#allocation10], %s314
        %p316 = pneg %p184
        %p317 = pneg %p181
        %s318 = sand.u32 %s171, 1
        %s319 = scalar_lea.sflag [#allocation12], %s318
        %s320 = sand.u32 %s171, 1
        %s321 = smul.addr %s320, 8
        %s322 = scalar_lea.vmem [#allocation11], %s321
        %s323 = smul.u32 16, %s44
        %s324 = sld [smem:[#allocation3 + %s42]]
        %v325 = vld [vmem:[%s272] sm:$0xff]
        %v326 = vld [vmem:[%s282] sm:$0xff]
        %v327 = vld [vmem:[%s282 + $0x8] sm:$0xff]
        %v328 = vld [vmem:[%s282 + $0x10] sm:$0xff]
        %v329 = vld [vmem:[%s282 + $0x18] sm:$0xff]
        %v330 = vld [vmem:[%s282 + $0x20] sm:$0xff]
        %v331 = vld [vmem:[%s282 + $0x28] sm:$0xff]
        %v332 = vld [vmem:[%s282 + $0x30] sm:$0xff]
        %v333 = vld [vmem:[%s282 + $0x38] sm:$0xff]
        %v334 = vld [vmem:[%s282 + $0x40] sm:$0xff]
        %v335 = vld [vmem:[%s282 + $0x48] sm:$0xff]
        %v336 = vld [vmem:[%s282 + $0x50] sm:$0xff]
        %v337 = vld [vmem:[%s282 + $0x58] sm:$0xff]
        %v338 = vld [vmem:[%s282 + $0x60] sm:$0xff]
        %v339 = vld [vmem:[%s282 + $0x68] sm:$0xff]
        %v340 = vld [vmem:[%s282 + $0x70] sm:$0xff]
        %v341 = vld [vmem:[%s282 + $0x78] sm:$0xff]
        %s342 = smul.u32 %s44, 128
        %v343 = vlaneseq
        %v344 = vand.u32 %v343, 127
        %v345 = vstv %s342
        %v346 = vadd.s32 %v345, %v344
        %v347 = vstv %s324
        %vm348 = vcmp.lt.s32.totalorder %v346, %v347
        %v349 = vsel %vm348, 0.0, -1e+30
        %350 = vmatpush.xpose.msra.mxu0 %v341
        %351 = vmatpush.xpose.msra.mxu0 %v340
        %352 = vmatpush.xpose.msra.mxu0 %v339
        %353 = vmatpush.xpose.msra.mxu0 %v338
        %354 = vmatpush.xpose.msra.mxu0 %v337
        %355 = vmatpush.xpose.msra.mxu0 %v336
        %356 = vmatpush.xpose.msra.mxu0 %v335
        %357 = vmatpush.xpose.msra.mxu0 %v334
        %358 = vmatpush.xpose.msra.mxu0 %v333
        %359 = vmatpush.xpose.msra.mxu0 %v332
        %360 = vmatpush.xpose.msra.mxu0 %v331
        %361 = vmatpush.xpose.msra.mxu0 %v330
        %362 = vmatpush.xpose.msra.mxu0 %v329
        %363 = vmatpush.xpose.msra.mxu0 %v328
        %364 = vmatpush.xpose.msra.mxu0 %v327
        %365 = vmatpush.xpose.msra.mxu0 %v326
        %366 = vmatmul.f32.gmra.mxu0 %v325
        %v367 = vpop.f32.mrf.mxu0
        %v368 = vadd.f32 %v349, %v367
        %369 = vdwg.mxu0
        %370 = vmax.xlane.f32.xlu0 %v368
        %v371 = vpop.xlane.xlu0 %370
        %v372 = vsub.f32 %v368, %v371
        %v373 = vmul.f32 %v372, 1.442695
        %v374 = vpow.pop %v373
        %375 = vadd.xlane.f32.xlu0 %v374
        %v376 = vpop.xlane.xlu0 %375
        %377 = vmatpush.msra.mxu0 %v341
        %378 = vmatpush.msra.mxu0 %v340
        %379 = vmatpush.msra.mxu0 %v339
        %380 = vmatpush.msra.mxu0 %v338
        %381 = vmatpush.msra.mxu0 %v337
        %382 = vmatpush.msra.mxu0 %v336
        %383 = vmatpush.msra.mxu0 %v335
        %384 = vmatpush.msra.mxu0 %v334
        %385 = vmatpush.msra.mxu0 %v333
        %386 = vmatpush.msra.mxu0 %v332
        %387 = vmatpush.msra.mxu0 %v331
        %388 = vmatpush.msra.mxu0 %v330
        %389 = vmatpush.msra.mxu0 %v329
        %390 = vmatpush.msra.mxu0 %v328
        %391 = vmatpush.msra.mxu0 %v327
        %392 = vmatpush.msra.mxu0 %v326
        %393 = vmatmul.f32.gmra.mxu0 %v374
        %v394 = vpop.f32.mrf.mxu0
        %v395 = vadd.f32 0.0, %v394
        %396 = vdwg.mxu0
        %v397 = vrcp.pop %v376
        %v398 = vmul.f32 %v376, %v397
        %v399 = vsub.f32 1.0, %v398
        %v400 = vmul.f32 %v397, %v399
        %v401 = vadd.f32 %v397, %v400
        %vm402 = vweird.f32 %v376
        %vm403 = vweird.f32 %v397
        %vm404 = vmor %vm402, %vm403
        %v405 = vsel %vm404, %v397, %v401
        %v406 = vand.u32 2147483647, %v376
        %vm407 = vcmp.eq.f32.partialorder %v406, 8.507059e+37
        %v408 = vand.u32 %v376, 2147483648
        %v409 = vor.u32 1.1754944e-38, %v408
        %v410 = vsel %vm407, %v409, %v405
        %v411 = vmul.f32 %v395, %v410
        %v412 = vld [vmem:[#allocation9] sm:$0xff]
        %v413 = vld [vmem:[#allocation9 + $0x8] sm:$0xff]
        %v414 = vld [vmem:[#allocation9 + $0x10] sm:$0xff]
        %v415 = vld [vmem:[#allocation9 + $0x18] sm:$0xff]
        %v416 = vld [vmem:[#allocation9 + $0x20] sm:$0xff]
        %v417 = vld [vmem:[#allocation9 + $0x28] sm:$0xff]
        %v418 = vld [vmem:[#allocation9 + $0x30] sm:$0xff]
        %v419 = vld [vmem:[#allocation9 + $0x38] sm:$0xff]
        %v420 = vld [vmem:[#allocation9 + $0x40] sm:$0xff]
        %v421 = vld [vmem:[#allocation9 + $0x48] sm:$0xff]
        %v422 = vld [vmem:[#allocation9 + $0x50] sm:$0xff]
        %v423 = vld [vmem:[#allocation9 + $0x58] sm:$0xff]
        %v424 = vld [vmem:[#allocation9 + $0x60] sm:$0xff]
        %v425 = vld [vmem:[#allocation9 + $0x68] sm:$0xff]
        %v426 = vld [vmem:[#allocation9 + $0x70] sm:$0xff]
        %v427 = vld [vmem:[#allocation9 + $0x78] sm:$0xff]
        %v428 = vld [vmem:[#allocation9 + $0x80] sm:$0xff]
        %v429 = vld [vmem:[#allocation9 + $0x88] sm:$0xff]
        %v430 = vld [vmem:[#allocation9 + $0x90] sm:$0xff]
        %v431 = vld [vmem:[#allocation9 + $0x98] sm:$0xff]
        %v432 = vld [vmem:[#allocation9 + $0xa0] sm:$0xff]
        %v433 = vld [vmem:[#allocation9 + $0xa8] sm:$0xff]
        %v434 = vld [vmem:[#allocation9 + $0xb0] sm:$0xff]
        %v435 = vld [vmem:[#allocation9 + $0xb8] sm:$0xff]
        %v436 = vld [vmem:[#allocation9 + $0xc0] sm:$0xff]
        %v437 = vld [vmem:[#allocation9 + $0xc8] sm:$0xff]
        %v438 = vld [vmem:[#allocation9 + $0xd0] sm:$0xff]
        %v439 = vld [vmem:[#allocation9 + $0xd8] sm:$0xff]
        %v440 = vld [vmem:[#allocation9 + $0xe0] sm:$0xff]
        %v441 = vld [vmem:[#allocation9 + $0xe8] sm:$0xff]
        %v442 = vld [vmem:[#allocation9 + $0xf0] sm:$0xff]
        %v443 = vld [vmem:[#allocation9 + $0xf8] sm:$0xff]
        %444 = vmatpush.msra.mxu0 %v443
        %445 = vmatpush.msra.mxu0 %v442
        %446 = vmatpush.msra.mxu0 %v441
        %447 = vmatpush.msra.mxu0 %v440
        %448 = vmatpush.msra.mxu0 %v439
        %449 = vmatpush.msra.mxu0 %v438
        %450 = vmatpush.msra.mxu0 %v437
        %451 = vmatpush.msra.mxu0 %v436
        %452 = vmatpush.msra.mxu0 %v435
        %453 = vmatpush.msra.mxu0 %v434
        %454 = vmatpush.msra.mxu0 %v433
        %455 = vmatpush.msra.mxu0 %v432
        %456 = vmatpush.msra.mxu0 %v431
        %457 = vmatpush.msra.mxu0 %v430
        %458 = vmatpush.msra.mxu0 %v429
        %459 = vmatpush.msra.mxu0 %v428
        %460 = vmatmul.f32.gmra.mxu0 %v325
        %v461 = vpop.f32.mrf.mxu0
        %v462 = vadd.f32 0.0, %v461
        %463 = vdwg.mxu0
        %464 = vmatpush.msra.mxu0 %v427
        %465 = vmatpush.msra.mxu0 %v426
        %466 = vmatpush.msra.mxu0 %v425
        %467 = vmatpush.msra.mxu0 %v424
        %468 = vmatpush.msra.mxu0 %v423
        %469 = vmatpush.msra.mxu0 %v422
        %470 = vmatpush.msra.mxu0 %v421
        %471 = vmatpush.msra.mxu0 %v420
        %472 = vmatpush.msra.mxu0 %v419
        %473 = vmatpush.msra.mxu0 %v418
        %474 = vmatpush.msra.mxu0 %v417
        %475 = vmatpush.msra.mxu0 %v416
        %476 = vmatpush.msra.mxu0 %v415
        %477 = vmatpush.msra.mxu0 %v414
        %478 = vmatpush.msra.mxu0 %v413
        %479 = vmatpush.msra.mxu0 %v412
        %480 = vmatmul.f32.gmra.mxu0 %v411
        %v481 = vpop.f32.mrf.mxu0
        %v482 = vadd.f32 %v462, %v481
        %483 = vdwg.mxu0
        %v484 = vtanh.pop %v482
        %485 = vst [vmem:[%s315] sm:$0xff] %v484
        %v486 = vmul.f32 %v374, %v410
        %487 = vst [vmem:[%s322] sm:$0xff] %v486
        %s488 = sand.u32 %s143, 1
        %s489 = scalar_lea.sflag [#allocation6], %s488
        %s490 = sand.u32 %s143, 1
        %s491 = smul.addr %s490, 8
        %s492 = scalar_lea.vmem [#allocation10], %s491
        %s493 = sand.u32 %s171, 1
        %s494 = scalar_lea.sflag [#allocation12], %s493
        %s495 = sand.u32 %s171, 1
        %s496 = smul.addr %s495, 8
        %s497 = scalar_lea.vmem [#allocation11], %s496
        // Predicated region
        $region45: #{tpu_custom_call.1} parent=31 // pred_check
          %p498 = pneg %p153
        $region46: #{tpu_custom_call.1} parent=31 // pred_check_branch
          %500 = sbr.rel (%p498) target = $region48
        $region47: #{tpu_custom_call.1} parent=31 // pred_region
          %502 = vsyncadd %s489, 0
          %s503 = sadd.s32 %s43, %s42
          %s504 = smul.addr %s503, 8
          %s505 = scalar_lea.hbm %s4, %s504
          %s507 = sshll.u32 %s492, 4
          %s508 = int_to_ptr.vmem [resolvable:$true] %s507
          %s509 = sshll.u32 %s505, 4
          %s510 = int_to_ptr.hbm [resolvable:$true] %s509
          %512 = dma.vmem_to_hbm [thread:$0]  %s508, 128, %s510, %s489
        $region48: #{tpu_custom_call.1} parent=31 // pred_fallthru
          _
        // Predicated region
        $region49: #{tpu_custom_call.1} parent=31 // pred_check
          %p513 = pneg %p181
        $region50: #{tpu_custom_call.1} parent=31 // pred_check_branch
          %515 = sbr.rel (%p513) target = $region52
        $region51: #{tpu_custom_call.1} parent=31 // pred_region
          %517 = vsyncadd %s494, 0
          %s518 = sadd.s32 %s43, %s42
          %s519 = smul.addr %s518, 8
          %s520 = scalar_lea.hbm %s5, %s519
          %s522 = sshll.u32 %s497, 4
          %s523 = int_to_ptr.vmem [resolvable:$true] %s522
          %s524 = sshll.u32 %s520, 4
          %s525 = int_to_ptr.hbm [resolvable:$true] %s524
          %527 = dma.vmem_to_hbm [thread:$0]  %s523, 128, %s525, %s494
        $region52: #{tpu_custom_call.1} parent=31 // pred_fallthru
          _
      $region32: #{tpu_custom_call.1} parent=5 // pred_fallthru
        _
      %p528 = scmp.le.s32.totalorder 2, %s32
      // Predicated region
      $region53: #{tpu_custom_call.1} parent=5 // pred_check
        %p529 = pneg %p528
      $region54: #{tpu_custom_call.1} parent=5 // pred_check_branch
        %531 = sbr.rel (%p529) target = $region56
      $region55: #{tpu_custom_call.1} parent=5 // pred_region
        %s532 = ssub.s32 %s32, 2
        // Predicated region
        $region57: #{tpu_custom_call.1} parent=55 // pred_check
          %p533 = pneg %p159
        $region58: #{tpu_custom_call.1} parent=55 // pred_check_branch
          %535 = sbr.rel (%p533) target = $region60
        $region59: #{tpu_custom_call.1} parent=55 // pred_region
          %s536 = sand.u32 %s144, 1
          %s537 = scalar_lea.sflag [#allocation6], %s536
          %s538 = sand.u32 %s144, 1
          %s539 = smul.addr %s538, 8
          %s540 = scalar_lea.vmem [#allocation10], %s539
          %542 = dma.done %s537, 128
        $region60: #{tpu_custom_call.1} parent=55 // pred_fallthru
          _
        // Predicated region
        $region61: #{tpu_custom_call.1} parent=55 // pred_check
          %p543 = pneg %p187
        $region62: #{tpu_custom_call.1} parent=55 // pred_check_branch
          %545 = sbr.rel (%p543) target = $region64
        $region63: #{tpu_custom_call.1} parent=55 // pred_region
          %s546 = sand.u32 %s172, 1
          %s547 = scalar_lea.sflag [#allocation12], %s546
          %s548 = sand.u32 %s172, 1
          %s549 = smul.addr %s548, 8
          %s550 = scalar_lea.vmem [#allocation11], %s549
          %552 = dma.done %s547, 128
        $region64: #{tpu_custom_call.1} parent=55 // pred_fallthru
          _
      $region56: #{tpu_custom_call.1} parent=5 // pred_fallthru
        _
    $region6: #{tpu_custom_call.1} parent=1 // loop_footer
      %s36 = sadd.s32 1, %s32
    $region7: #{tpu_custom_call.1} parent=1 // loop_footer_branch
      %31 = sbr.rel target = $region3
    $region8: #{tpu_custom_call.1} parent=1 // loop_exit
      _
    %553 = vsyncpa [#allocation5], 1
    %s554 = scalar_lea.sflag [#allocation5], 1
    %555 = vsyncpa %s554, 1
    %556 = vsyncpa [#allocation8], 1
    %s557 = scalar_lea.sflag [#allocation8], 1
    %558 = vsyncpa %s557, 1
    %559 = vsyncpa [#allocation6], 1
    %s560 = scalar_lea.sflag [#allocation6], 1
    %561 = vsyncpa %s560, 1
    %562 = vsyncpa [#allocation12], 1
    %s563 = scalar_lea.sflag [#allocation12], 1
    %564 = vsyncpa %s563, 1

</llo_original>
